<compile_context>
chip_gen: v6e
topology: v6e:2x2x1
jax: 0.10.0
libtpu: 0.0.40
codegen_flags: <defaults>
</compile_context>

<pallas_src>
import jax
import jax.numpy as jnp
from jax.experimental import pallas as pl
from jax.experimental.pallas import tpu as pltpu

DROPOUT_P = 0.2
# Signed-int32 view of round(p * 2**32): for a uniform 32-bit word,
# P[int32_view(bits) >= threshold] == 1 - p, so `keep = bits >= threshold`.
_DROP_THRESHOLD_I32 = int(round(DROPOUT_P * (1 << 32))) - (1 << 31)


def _round_up(x, m):
    return (x + m - 1) // m * m


def ffn_kernel(x_ref, bits_ref,
               w1_ref, b1_ref, w2_ref, b2_ref,
               w3_ref, b3_ref, w4_ref, b4_ref,
               out_ref):
    # fc1 + ReLU1  (bf16 operands, f32 MXU accumulation)
    h = jnp.dot(x_ref[...], w1_ref[...], preferred_element_type=jnp.float32) + b1_ref[...]
    h = jnp.maximum(h, 0.0).astype(jnp.bfloat16)

    # fc2 + ReLU2
    h = jnp.dot(h, w2_ref[...], preferred_element_type=jnp.float32) + b2_ref[...]
    h = jnp.maximum(h, 0.0).astype(jnp.bfloat16)

    # fc3  (requires hidden1 == hidden2, as in the original module)
    h = jnp.dot(h, w3_ref[...], preferred_element_type=jnp.float32) + b3_ref[...]

    # Dropout(p=0.2), training mode.  keep <=> bits >= p*2^32 (signed view);
    # the 1/(1-p) survivor scale is folded into w4 at pack time.
    keep = bits_ref[...] >= jnp.int32(_DROP_THRESHOLD_I32)
    h = jnp.where(keep, h, 0.0)

    # "ReLU3" (attribute missing in the original module; interpreted as ReLU)
    h = jnp.maximum(h, 0.0).astype(jnp.bfloat16)

    # fc4 (padded to 128 lane-dense columns) + softmax over the last axis.
    logits = jnp.dot(h, w4_ref[...], preferred_element_type=jnp.float32) + b4_ref[...]
    m = jnp.max(logits, axis=-1, keepdims=True)
    e = jnp.exp(logits - m)
    inv = 1.0 / jnp.sum(e, axis=-1, keepdims=True)   # multiply by reciprocal, not per-lane divide
    out_ref[...] = e * inv


def pack_params(params, num_classes, lane=128):
    """One-time parameter packing (do NOT redo this per forward call):
       * transpose torch (out, in) weights -> (in, out) row-major for the MXU,
       * cast weights to bfloat16 (halves the dominant w1 DMA, native MXU rate),
       * fold the dropout 1/(1-p) scale into fc4,
       * pad fc4 to a lane-dense multiple of 128 output columns; padded bias
         columns get -1e30 so softmax assigns them exactly zero mass.
    """
    n_pad = _round_up(max(num_classes, 1), lane)

    def wt(w):  # torch (out, in) -> (in, out), bf16
        return jnp.asarray(w).T.astype(jnp.bfloat16)

    def bias(b):
        return jnp.asarray(b, jnp.float32).reshape(1, -1)

    w4 = jnp.asarray(params["w4"]).T / (1.0 - DROPOUT_P)            # (h2, ncls)
    w4 = jnp.pad(w4, ((0, 0), (0, n_pad - num_classes))).astype(jnp.bfloat16)
    b4 = jnp.pad(jnp.asarray(params["b4"], jnp.float32),
                 (0, n_pad - num_classes), constant_values=-1e30).reshape(1, n_pad)

    return dict(
        w1=wt(params["w1"]), b1=bias(params["b1"]),
        w2=wt(params["w2"]), b2=bias(params["b2"]),
        w3=wt(params["w3"]), b3=bias(params["b3"]),
        w4=w4, b4=b4,
        num_classes=num_classes, n_pad=n_pad,
    )


def feedforward_pallas(x_nchw, packed, dropout_key, *, block_m=128):
    """Fused forward pass.  x_nchw: (B, C, H, W) float32; packed from pack_params."""
    B = x_nchw.shape[0]
    x2d = x_nchw.reshape(B, -1).astype(jnp.bfloat16)   # x.view(-1, num_flat_features(x))
    K = x2d.shape[1]
    H1 = packed["w1"].shape[1]
    H2 = packed["w2"].shape[1]
    NP = packed["n_pad"]
    num_classes = packed["num_classes"]

    # Batch tiling: full MXU-height tiles when B is large, shrink to a multiple
    # of the 8-row sublane for tiny batches.
    bp = _round_up(B, 8)
    tm = min(block_m, bp)
    bp = _round_up(bp, tm)
    grid_m = bp // tm

    x_p = jnp.pad(x2d, ((0, bp - B), (0, 0)))

    # Dropout randomness generated host-side (the in-kernel TPU hardware PRNG
    # has no interpret-mode lowering).  Distinct bits per row => automatically
    # distinct across batch tiles / TensorCores.
    bits = jax.lax.bitcast_convert_type(
        jax.random.bits(dropout_key, (bp, H2), dtype=jnp.uint32), jnp.int32)

    out = pl.pallas_call(
        ffn_kernel,
        out_shape=jax.ShapeDtypeStruct((bp, NP), jnp.float32),
        grid=(grid_m,),
        in_specs=[
            pl.BlockSpec((tm, K), lambda i: (i, 0)),    # x tile
            pl.BlockSpec((tm, H2), lambda i: (i, 0)),   # dropout bits tile
            pl.BlockSpec((K, H1), lambda i: (0, 0)),    # w1 (resident across tiles)
            pl.BlockSpec((1, H1), lambda i: (0, 0)),    # b1
            pl.BlockSpec((H1, H2), lambda i: (0, 0)),   # w2
            pl.BlockSpec((1, H2), lambda i: (0, 0)),    # b2
            pl.BlockSpec((H1, H2), lambda i: (0, 0)),   # w3 (needs H1 == H2)
            pl.BlockSpec((1, H2), lambda i: (0, 0)),    # b3
            pl.BlockSpec((H2, NP), lambda i: (0, 0)),   # w4 (padded, dropout scale folded in)
            pl.BlockSpec((1, NP), lambda i: (0, 0)),    # b4 (padded with -1e30)
        ],
        out_specs=pl.BlockSpec((tm, NP), lambda i: (i, 0)),
        compiler_params=pltpu.CompilerParams(
            dimension_semantics=("parallel",)),         # v7x: both TCs split batch tiles
    )(x_p, bits, packed["w1"], packed["b1"], packed["w2"], packed["b2"],
      packed["w3"], packed["b3"], packed["w4"], packed["b4"])

    # Slice off batch padding and the lane padding of the output.
    return out[:B, :num_classes]


def init_params(key, input_size, hidden1, hidden2, num_classes):
    """Deterministic uniform(-1/sqrt(fan_in), 1/sqrt(fan_in)) init, torch-style shapes."""
    ks = jax.random.split(key, 8)

    def lin(kw, kb, fan_in, fan_out):
        bound = 1.0 / (fan_in ** 0.5)
        w = jax.random.uniform(kw, (fan_out, fan_in), jnp.float32, -bound, bound)
        b = jax.random.uniform(kb, (fan_out,), jnp.float32, -bound, bound)
        return w, b

    w1, b1 = lin(ks[0], ks[1], input_size, hidden1)
    w2, b2 = lin(ks[2], ks[3], hidden1, hidden2)
    w3, b3 = lin(ks[4], ks[5], hidden1, hidden2)   # as declared in __init__ (needs h1 == h2)
    w4, b4 = lin(ks[6], ks[7], hidden2, num_classes)
    return dict(w1=w1, b1=b1, w2=w2, b2=b2, w3=w3, b3=b3, w4=w4, b4=b4)


if __name__ == "__main__":
    # Small but MXU-friendly shapes: batch feeds full 128-row tiles (2 grid
    # steps), input_size = C*H*W = 1024, hidden1 == hidden2 = 128 (required by
    # the module's fc3), num_classes = 16 (padded to 128 lanes internally).
    B, C, H, W = 256, 4, 16, 16
    input_size = C * H * W
    hidden1 = hidden2 = 128
    num_classes = 16
    # TODO(synk): hidden3_size exists in the module's __init__ signature but is
    # never used by forward(), so it is not represented here.

    key = jax.random.PRNGKey(0)
    kx, kp, kd = jax.random.split(key, 3)
    x = jax.random.normal(kx, (B, C, H, W), dtype=jnp.float32)

    params = init_params(kp, input_size, hidden1, hidden2, num_classes)
    packed = pack_params(params, num_classes)   # one-time packing, reused every call

    out = feedforward_pallas(x, packed, kd)
    out = jax.block_until_ready(out)

    assert out.shape == (B, num_classes)
    assert bool(jnp.all(jnp.isfinite(out)))
    # softmax rows sum to 1 (pad columns carry exactly zero mass)
    assert bool(jnp.allclose(jnp.sum(out, axis=-1), 1.0, atol=1e-3))
    print("KERNEL_OK")
</pallas_src>

<mosaic_0001>
module attributes {stable_mosaic.version = 11 : i64} {
  func.func @ffn_kernel(%arg0: i32, %arg1: memref<128x1024xbf16, #tpu.memory_space<vmem>>, %arg2: memref<128x128xi32, #tpu.memory_space<vmem>>, %arg3: memref<1024x128xbf16, #tpu.memory_space<vmem>>, %arg4: memref<1x128xf32, #tpu.memory_space<vmem>>, %arg5: memref<128x128xbf16, #tpu.memory_space<vmem>>, %arg6: memref<1x128xf32, #tpu.memory_space<vmem>>, %arg7: memref<128x128xbf16, #tpu.memory_space<vmem>>, %arg8: memref<1x128xf32, #tpu.memory_space<vmem>>, %arg9: memref<128x128xbf16, #tpu.memory_space<vmem>>, %arg10: memref<1x128xf32, #tpu.memory_space<vmem>>, %arg11: memref<128x128xf32, #tpu.memory_space<vmem>>) attributes {dimension_semantics = [#tpu.dimension_semantics<parallel>], iteration_bounds = array<i64: 2>, scalar_prefetch = 0 : i64, scratch_operands = 0 : i64, tpu.core_type = #tpu.core_type<tc>, window_params = [{transform_indices = @transform_0, window_bounds = array<i64: 128, 1024>}, {transform_indices = @transform_1, window_bounds = array<i64: 128, 128>}, {pipeline_mode = #tpu.pipeline_mode<synchronous>, transform_indices = @transform_2, window_bounds = array<i64: 1024, 128>}, {pipeline_mode = #tpu.pipeline_mode<synchronous>, transform_indices = @transform_3, window_bounds = array<i64: 1, 128>}, {pipeline_mode = #tpu.pipeline_mode<synchronous>, transform_indices = @transform_4, window_bounds = array<i64: 128, 128>}, {pipeline_mode = #tpu.pipeline_mode<synchronous>, transform_indices = @transform_5, window_bounds = array<i64: 1, 128>}, {pipeline_mode = #tpu.pipeline_mode<synchronous>, transform_indices = @transform_6, window_bounds = array<i64: 128, 128>}, {pipeline_mode = #tpu.pipeline_mode<synchronous>, transform_indices = @transform_7, window_bounds = array<i64: 1, 128>}, {pipeline_mode = #tpu.pipeline_mode<synchronous>, transform_indices = @transform_8, window_bounds = array<i64: 128, 128>}, {pipeline_mode = #tpu.pipeline_mode<synchronous>, transform_indices = @transform_9, window_bounds = array<i64: 1, 128>}, {transform_indices = @transform_10, window_bounds = array<i64: 128, 128>}]} {
    %c0 = arith.constant 0 : index
    %c0_0 = arith.constant 0 : index
    %0 = vector.load %arg1[%c0, %c0_0] : memref<128x1024xbf16, #tpu.memory_space<vmem>>, vector<128x1024xbf16>
    %c0_1 = arith.constant 0 : index
    %c0_2 = arith.constant 0 : index
    %1 = vector.load %arg3[%c0_1, %c0_2] : memref<1024x128xbf16, #tpu.memory_space<vmem>>, vector<1024x128xbf16>
    %cst = arith.constant dense<0.000000e+00> : vector<128x128xf32>
    %2 = tpu.matmul %0, %1, %cst {dimension_numbers = #tpu.dot_dimension_numbers<[1], [0], [0], [1], [0, 0, 1, 1], [], []>} : vector<128x1024xbf16>, vector<1024x128xbf16>, vector<128x128xf32> -> vector<128x128xf32>
    %c0_3 = arith.constant 0 : index
    %c0_4 = arith.constant 0 : index
    %3 = vector.load %arg4[%c0_3, %c0_4] : memref<1x128xf32, #tpu.memory_space<vmem>>, vector<1x128xf32>
    %4 = vector.broadcast %3 : vector<1x128xf32> to vector<128x128xf32>
    %5 = arith.addf %2, %4 : vector<128x128xf32>
    %cst_5 = arith.constant 0.000000e+00 : f32
    %6 = vector.broadcast %cst_5 : f32 to vector<128x128xf32>
    %7 = arith.maximumf %5, %6 : vector<128x128xf32>
    %8 = arith.truncf %7 : vector<128x128xf32> to vector<128x128xbf16>
    %c0_6 = arith.constant 0 : index
    %c0_7 = arith.constant 0 : index
    %9 = vector.load %arg5[%c0_6, %c0_7] : memref<128x128xbf16, #tpu.memory_space<vmem>>, vector<128x128xbf16>
    %cst_8 = arith.constant dense<0.000000e+00> : vector<128x128xf32>
    %10 = tpu.matmul %8, %9, %cst_8 {dimension_numbers = #tpu.dot_dimension_numbers<[1], [0], [0], [1], [0, 0, 1, 1], [], []>} : vector<128x128xbf16>, vector<128x128xbf16>, vector<128x128xf32> -> vector<128x128xf32>
    %c0_9 = arith.constant 0 : index
    %c0_10 = arith.constant 0 : index
    %11 = vector.load %arg6[%c0_9, %c0_10] : memref<1x128xf32, #tpu.memory_space<vmem>>, vector<1x128xf32>
    %12 = vector.broadcast %11 : vector<1x128xf32> to vector<128x128xf32>
    %13 = arith.addf %10, %12 : vector<128x128xf32>
    %cst_11 = arith.constant 0.000000e+00 : f32
    %14 = vector.broadcast %cst_11 : f32 to vector<128x128xf32>
    %15 = arith.maximumf %13, %14 : vector<128x128xf32>
    %16 = arith.truncf %15 : vector<128x128xf32> to vector<128x128xbf16>
    %c0_12 = arith.constant 0 : index
    %c0_13 = arith.constant 0 : index
    %17 = vector.load %arg7[%c0_12, %c0_13] : memref<128x128xbf16, #tpu.memory_space<vmem>>, vector<128x128xbf16>
    %cst_14 = arith.constant dense<0.000000e+00> : vector<128x128xf32>
    %18 = tpu.matmul %16, %17, %cst_14 {dimension_numbers = #tpu.dot_dimension_numbers<[1], [0], [0], [1], [0, 0, 1, 1], [], []>} : vector<128x128xbf16>, vector<128x128xbf16>, vector<128x128xf32> -> vector<128x128xf32>
    %c0_15 = arith.constant 0 : index
    %c0_16 = arith.constant 0 : index
    %19 = vector.load %arg8[%c0_15, %c0_16] : memref<1x128xf32, #tpu.memory_space<vmem>>, vector<1x128xf32>
    %20 = vector.broadcast %19 : vector<1x128xf32> to vector<128x128xf32>
    %21 = arith.addf %18, %20 : vector<128x128xf32>
    %c0_17 = arith.constant 0 : index
    %c0_18 = arith.constant 0 : index
    %22 = vector.load %arg2[%c0_17, %c0_18] : memref<128x128xi32, #tpu.memory_space<vmem>>, vector<128x128xi32>
    %c-1288490189_i32 = arith.constant -1288490189 : i32
    %23 = vector.broadcast %c-1288490189_i32 : i32 to vector<128x128xi32>
    %24 = arith.cmpi sge, %22, %23 : vector<128x128xi32>
    %cst_19 = arith.constant 0.000000e+00 : f32
    %25 = vector.broadcast %cst_19 : f32 to vector<128x128xf32>
    %26 = arith.select %24, %21, %25 : vector<128x128xi1>, vector<128x128xf32>
    %cst_20 = arith.constant 0.000000e+00 : f32
    %27 = vector.broadcast %cst_20 : f32 to vector<128x128xf32>
    %28 = arith.maximumf %26, %27 : vector<128x128xf32>
    %29 = arith.truncf %28 : vector<128x128xf32> to vector<128x128xbf16>
    %c0_21 = arith.constant 0 : index
    %c0_22 = arith.constant 0 : index
    %30 = vector.load %arg9[%c0_21, %c0_22] : memref<128x128xbf16, #tpu.memory_space<vmem>>, vector<128x128xbf16>
    %cst_23 = arith.constant dense<0.000000e+00> : vector<128x128xf32>
    %31 = tpu.matmul %29, %30, %cst_23 {dimension_numbers = #tpu.dot_dimension_numbers<[1], [0], [0], [1], [0, 0, 1, 1], [], []>} : vector<128x128xbf16>, vector<128x128xbf16>, vector<128x128xf32> -> vector<128x128xf32>
    %c0_24 = arith.constant 0 : index
    %c0_25 = arith.constant 0 : index
    %32 = vector.load %arg10[%c0_24, %c0_25] : memref<1x128xf32, #tpu.memory_space<vmem>>, vector<1x128xf32>
    %33 = vector.broadcast %32 : vector<1x128xf32> to vector<128x128xf32>
    %34 = arith.addf %31, %33 : vector<128x128xf32>
    %cst_26 = arith.constant dense<0xFF800000> : vector<128xf32>
    %35 = vector.multi_reduction <maximumf>, %34, %cst_26 [1] : vector<128x128xf32> to vector<128xf32>
    %36 = vector.shape_cast %35 : vector<128xf32> to vector<128x1xf32>
    %37 = vector.broadcast %36 : vector<128x1xf32> to vector<128x128xf32>
    %38 = arith.subf %34, %37 : vector<128x128xf32>
    %39 = math.exp %38 : vector<128x128xf32>
    %cst_27 = arith.constant dense<0.000000e+00> : vector<128xf32>
    %40 = vector.multi_reduction <add>, %39, %cst_27 [1] : vector<128x128xf32> to vector<128xf32>
    %41 = vector.shape_cast %40 : vector<128xf32> to vector<128x1xf32>
    %cst_28 = arith.constant 1.000000e+00 : f32
    %42 = vector.broadcast %cst_28 : f32 to vector<128x1xf32>
    %43 = arith.divf %42, %41 : vector<128x1xf32>
    %44 = vector.broadcast %43 : vector<128x1xf32> to vector<128x128xf32>
    %45 = arith.mulf %39, %44 : vector<128x128xf32>
    %c0_29 = arith.constant 0 : index
    %c0_30 = arith.constant 0 : index
    %46 = vector.load %arg11[%c0_29, %c0_30] : memref<128x128xf32, #tpu.memory_space<vmem>>, vector<128x128xf32>
    tpu.vector_store %arg11[%c0_29, %c0_30], %45 {strides = array<i32>} : memref<128x128xf32, #tpu.memory_space<vmem>>, vector<128x128xf32>,
    return
  }
  func.func @transform_0(%arg0: i32) -> (i32, i32) {
    %c0_i32 = arith.constant 0 : i32
    %c0_i32_0 = arith.constant 0 : i32
    return %arg0, %c0_i32 : i32, i32
  }
  func.func @transform_1(%arg0: i32) -> (i32, i32) {
    %c0_i32 = arith.constant 0 : i32
    %c0_i32_0 = arith.constant 0 : i32
    return %arg0, %c0_i32 : i32, i32
  }
  func.func @transform_2(%arg0: i32) -> (i32, i32) {
    %c0_i32 = arith.constant 0 : i32
    %c0_i32_0 = arith.constant 0 : i32
    %c0_i32_1 = arith.constant 0 : i32
    return %c0_i32, %c0_i32_0 : i32, i32
  }
  func.func @transform_3(%arg0: i32) -> (i32, i32) {
    %c0_i32 = arith.constant 0 : i32
    %c0_i32_0 = arith.constant 0 : i32
    %c0_i32_1 = arith.constant 0 : i32
    return %c0_i32, %c0_i32_0 : i32, i32
  }
  func.func @transform_4(%arg0: i32) -> (i32, i32) {
    %c0_i32 = arith.constant 0 : i32
    %c0_i32_0 = arith.constant 0 : i32
    %c0_i32_1 = arith.constant 0 : i32
    return %c0_i32, %c0_i32_0 : i32, i32
  }
  func.func @transform_5(%arg0: i32) -> (i32, i32) {
    %c0_i32 = arith.constant 0 : i32
    %c0_i32_0 = arith.constant 0 : i32
    %c0_i32_1 = arith.constant 0 : i32
    return %c0_i32, %c0_i32_0 : i32, i32
  }
  func.func @transform_6(%arg0: i32) -> (i32, i32) {
    %c0_i32 = arith.constant 0 : i32
    %c0_i32_0 = arith.constant 0 : i32
    %c0_i32_1 = arith.constant 0 : i32
    return %c0_i32, %c0_i32_0 : i32, i32
  }
  func.func @transform_7(%arg0: i32) -> (i32, i32) {
    %c0_i32 = arith.constant 0 : i32
    %c0_i32_0 = arith.constant 0 : i32
    %c0_i32_1 = arith.constant 0 : i32
    return %c0_i32, %c0_i32_0 : i32, i32
  }
  func.func @transform_8(%arg0: i32) -> (i32, i32) {
    %c0_i32 = arith.constant 0 : i32
    %c0_i32_0 = arith.constant 0 : i32
    %c0_i32_1 = arith.constant 0 : i32
    return %c0_i32, %c0_i32_0 : i32, i32
  }
  func.func @transform_9(%arg0: i32) -> (i32, i32) {
    %c0_i32 = arith.constant 0 : i32
    %c0_i32_0 = arith.constant 0 : i32
    %c0_i32_1 = arith.constant 0 : i32
    return %c0_i32, %c0_i32_0 : i32, i32
  }
  func.func @transform_10(%arg0: i32) -> (i32, i32) {
    %c0_i32 = arith.constant 0 : i32
    %c0_i32_0 = arith.constant 0 : i32
    return %arg0, %c0_i32 : i32, i32
  }
}

</mosaic_0001>

<llo_original>
// kernel: tpu_custom_call.1
$region0: #{tpu_custom_call.1}
  #allocation0 [shape = 'u32[]', space=smem, size = 0x4, offset = 0x4, fixed_abs, tag = 'smem constant byte address 0x4 - core index']
  #allocation1 [shape = 'u32[144,128]{1,0:T(1,128)}', space=vmem, size = 0x12000, scoped, tag = 'internal scratch']
  %s0 = inlined_call_operand.hbm [shape: bf16[256,1024], index: 0, kind: input, shape index: {}]
  %s1 = inlined_call_operand.hbm [shape: s32[256,128], index: 1, kind: input, shape index: {}]
  %s2 = inlined_call_operand.hbm [shape: bf16[1024,128], index: 2, kind: input, shape index: {}]
  %s3 = inlined_call_operand.vmem [shape: f32[1,128], index: 3, kind: input, shape index: {}]
  %s4 = inlined_call_operand.hbm [shape: bf16[128,128], index: 4, kind: input, shape index: {}]
  %s5 = inlined_call_operand.vmem [shape: f32[1,128], index: 5, kind: input, shape index: {}]
  %s6 = inlined_call_operand.hbm [shape: bf16[128,128], index: 6, kind: input, shape index: {}]
  %s7 = inlined_call_operand.vmem [shape: f32[1,128], index: 7, kind: input, shape index: {}]
  %s8 = inlined_call_operand.hbm [shape: bf16[128,128], index: 8, kind: input, shape index: {}]
  %s9 = inlined_call_operand.vmem [shape: f32[1,128], index: 9, kind: input, shape index: {}]
  %s10 = inlined_call_operand.hbm [shape: f32[256,128], index: 10, kind: output, shape index: {}]
  %s11 = sld [smem:[#allocation0]]
  $region97: #{tpu_custom_call.1} parent=0
    _
  %s13 = ssub.s32 1, %s11
  %s14 = scalar_select 0, %s13, %s11
  $region1: #{tpu_custom_call.1} parent=0
    #allocation2 [shape = 'u8[524288]{0}', space=vmem, size = 0x80000, scoped, tag = 'input window, operand 0']
    #allocation3 [shape = 's32[2]{0}', space=sflag, size = 0x8, scoped, tag = 'scoped memory for tpu_custom_call.1']
    #allocation4 [shape = 's32[2]{0}', space=sflag, size = 0x8, scoped, tag = 'scoped memory for tpu_custom_call.1']
    #allocation5 [shape = 'u8[131072]{0}', space=vmem, size = 0x20000, scoped, tag = 'input window, operand 1']
    #allocation6 [shape = 's32[2]{0}', space=sflag, size = 0x8, scoped, tag = 'scoped memory for tpu_custom_call.1']
    #allocation7 [shape = 'u8[262144]{0}', space=vmem, size = 0x40000, scoped, tag = 'input window, operand 2, single buffered']
    #allocation8 [shape = 'u8[32768]{0}', space=vmem, size = 0x8000, scoped, tag = 'input window, operand 4, single buffered']
    #allocation9 [shape = 's32[1]{0}', space=sflag, size = 0x4, scoped, tag = 'scoped memory for tpu_custom_call.1']
    #allocation10 [shape = 'u8[32768]{0}', space=vmem, size = 0x8000, scoped, tag = 'input window, operand 6, single buffered']
    #allocation11 [shape = 'u8[32768]{0}', space=vmem, size = 0x8000, scoped, tag = 'input window, operand 8, single buffered']
    #allocation12 [shape = 's32[1]{0}', space=sflag, size = 0x4, scoped, tag = 'scoped memory for tpu_custom_call.1']
    #allocation13 [shape = 'u8[131072]{0}', space=vmem, size = 0x20000, scoped, tag = 'output window, operand 0']
    %15 = vsyncpa [#allocation3], 0
    %s16 = scalar_lea.sflag [#allocation3], 1
    %17 = vsyncpa %s16, 0
    %18 = vsyncpa [#allocation6], 0
    %s19 = scalar_lea.sflag [#allocation6], 1
    %20 = vsyncpa %s19, 0
    %21 = vsyncpa [#allocation9], 0
    %22 = vsyncpa [#allocation12], 0
    %23 = vsyncpa [#allocation4], 0
    %s24 = scalar_lea.sflag [#allocation4], 1
    %25 = vsyncpa %s24, 0
    loop: start=0, step=1, limit=4
    $region2: #{tpu_custom_call.1} parent=1 // loop_pre_header
      _
    $region3: #{tpu_custom_call.1} parent=1 // loop_header
      %s27 = sphi 0, %s31
      %p28 = scmp.ge.s32.totalorder %s27, 4
      %s37 = sphi 0, %s39
      %s40 = sphi 0, %s37
      %s41 = sphi 0, %s40
      %s57 = sphi 0, %s41
      %s63 = sphi 0, %s65
      %s66 = sphi 0, %s63
      %s67 = sphi 0, %s66
      %s83 = sphi 0, %s67
      %s87 = sphi 0, %s87
      %s89 = sphi 0, %s87
      %s90 = sphi 0, %s89
      %s104 = sphi 0, %s90
      %s108 = sphi 0, %s108
      %s110 = sphi 0, %s108
      %s111 = sphi 0, %s110
      %s125 = sphi 0, %s111
      %s129 = sphi 0, %s129
      %s131 = sphi 0, %s129
      %s132 = sphi 0, %s131
      %s146 = sphi 0, %s132
      %s150 = sphi 0, %s150
      %s152 = sphi 0, %s150
      %s153 = sphi 0, %s152
      %s167 = sphi 0, %s153
      %s171 = sphi 0, %s171
      %s173 = sphi 0, %s171
      %s174 = sphi 0, %s173
      %s188 = sphi 0, %s174
      %s192 = sphi 0, %s192
      %s194 = sphi 0, %s192
      %s195 = sphi 0, %s194
      %s209 = sphi 0, %s195
      %s213 = sphi 0, %s213
      %s215 = sphi 0, %s213
      %s216 = sphi 0, %s215
      %s230 = sphi 0, %s216
      %s234 = sphi 0, %s234
      %s236 = sphi 0, %s234
      %s237 = sphi 0, %s236
      %s251 = sphi 0, %s237
      %s257 = sphi 0, %s259
      %s260 = sphi 0, %s257
      %s261 = sphi 0, %s260
      %s277 = sphi 0, %s261
    $region4: #{tpu_custom_call.1} parent=1 // loop_header_branch
      %30 = sbr.rel (%p28) target = $region8
    $region5: #{tpu_custom_call.1} parent=1 // loop_body
      %s32 = ssub.s32 %s27, 1
      %s33 = ssub.s32 %s27, 2
      %s34 = sadd.s32 %s27, 1
      %s35 = ssub.s32 %s27, %s34
      %p36 = scmp.eq.s32.totalorder %s35, 0
      %s38 = sadd.s32 %s37, 1
      %s39 = scalar_select %p36, %s37, %s38
      %p42 = pneg %p36
      %p43 = scmp.eq.s32.totalorder %s27, 1
      %p44 = por %p42, %p43
      %p45 = scmp.ne.s32.totalorder %s37, %s40
      %p46 = scmp.eq.s32.totalorder %s27, 0
      %p47 = por %p45, %p46
      %p48 = scmp.ne.s32.totalorder %s37, %s40
      %p49 = scmp.eq.s32.totalorder %s32, 1
      %p50 = por %p48, %p49
      %p51 = scmp.ne.s32.totalorder %s40, %s41
      %p52 = scmp.eq.s32.totalorder %s32, 0
      %p53 = por %p51, %p52
      %p54 = scmp.ne.s32.totalorder %s40, %s41
      %p55 = scmp.eq.s32.totalorder %s33, 1
      %p56 = por %p54, %p55
      %p58 = scmp.ne.s32.totalorder %s41, %s57
      %p59 = scmp.eq.s32.totalorder %s33, 0
      %p60 = por %p58, %p59
      %s61 = ssub.s32 %s27, %s34
      %p62 = scmp.eq.s32.totalorder %s61, 0
      %s64 = sadd.s32 %s63, 1
      %s65 = scalar_select %p62, %s63, %s64
      %p68 = pneg %p62
      %p69 = scmp.eq.s32.totalorder %s27, 1
      %p70 = por %p68, %p69
      %p71 = scmp.ne.s32.totalorder %s63, %s66
      %p72 = scmp.eq.s32.totalorder %s27, 0
      %p73 = por %p71, %p72
      %p74 = scmp.ne.s32.totalorder %s63, %s66
      %p75 = scmp.eq.s32.totalorder %s32, 1
      %p76 = por %p74, %p75
      %p77 = scmp.ne.s32.totalorder %s66, %s67
      %p78 = scmp.eq.s32.totalorder %s32, 0
      %p79 = por %p77, %p78
      %p80 = scmp.ne.s32.totalorder %s66, %s67
      %p81 = scmp.eq.s32.totalorder %s33, 1
      %p82 = por %p80, %p81
      %p84 = scmp.ne.s32.totalorder %s67, %s83
      %p85 = scmp.eq.s32.totalorder %s33, 0
      %p86 = por %p84, %p85
      %s88 = sadd.s32 %s87, 1
      %p91 = scmp.eq.s32.totalorder %s27, 1
      %p92 = scmp.ne.s32.totalorder %s87, %s89
      %p93 = scmp.eq.s32.totalorder %s27, 0
      %p94 = por %p92, %p93
      %p95 = scmp.ne.s32.totalorder %s87, %s89
      %p96 = scmp.eq.s32.totalorder %s32, 1
      %p97 = por %p95, %p96
      %p98 = scmp.ne.s32.totalorder %s89, %s90
      %p99 = scmp.eq.s32.totalorder %s32, 0
      %p100 = por %p98, %p99
      %p101 = scmp.ne.s32.totalorder %s89, %s90
      %p102 = scmp.eq.s32.totalorder %s33, 1
      %p103 = por %p101, %p102
      %p105 = scmp.ne.s32.totalorder %s90, %s104
      %p106 = scmp.eq.s32.totalorder %s33, 0
      %p107 = por %p105, %p106
      %s109 = sadd.s32 %s108, 1
      %p112 = scmp.eq.s32.totalorder %s27, 1
      %p113 = scmp.ne.s32.totalorder %s108, %s110
      %p114 = scmp.eq.s32.totalorder %s27, 0
      %p115 = por %p113, %p114
      %p116 = scmp.ne.s32.totalorder %s108, %s110
      %p117 = scmp.eq.s32.totalorder %s32, 1
      %p118 = por %p116, %p117
      %p119 = scmp.ne.s32.totalorder %s110, %s111
      %p120 = scmp.eq.s32.totalorder %s32, 0
      %p121 = por %p119, %p120
      %p122 = scmp.ne.s32.totalorder %s110, %s111
      %p123 = scmp.eq.s32.totalorder %s33, 1
      %p124 = por %p122, %p123
      %p126 = scmp.ne.s32.totalorder %s111, %s125
      %p127 = scmp.eq.s32.totalorder %s33, 0
      %p128 = por %p126, %p127
      %s130 = sadd.s32 %s129, 1
      %p133 = scmp.eq.s32.totalorder %s27, 1
      %p134 = scmp.ne.s32.totalorder %s129, %s131
      %p135 = scmp.eq.s32.totalorder %s27, 0
      %p136 = por %p134, %p135
      %p137 = scmp.ne.s32.totalorder %s129, %s131
      %p138 = scmp.eq.s32.totalorder %s32, 1
      %p139 = por %p137, %p138
      %p140 = scmp.ne.s32.totalorder %s131, %s132
      %p141 = scmp.eq.s32.totalorder %s32, 0
      %p142 = por %p140, %p141
      %p143 = scmp.ne.s32.totalorder %s131, %s132
      %p144 = scmp.eq.s32.totalorder %s33, 1
      %p145 = por %p143, %p144
      %p147 = scmp.ne.s32.totalorder %s132, %s146
      %p148 = scmp.eq.s32.totalorder %s33, 0
      %p149 = por %p147, %p148
      %s151 = sadd.s32 %s150, 1
      %p154 = scmp.eq.s32.totalorder %s27, 1
      %p155 = scmp.ne.s32.totalorder %s150, %s152
      %p156 = scmp.eq.s32.totalorder %s27, 0
      %p157 = por %p155, %p156
      %p158 = scmp.ne.s32.totalorder %s150, %s152
      %p159 = scmp.eq.s32.totalorder %s32, 1
      %p160 = por %p158, %p159
      %p161 = scmp.ne.s32.totalorder %s152, %s153
      %p162 = scmp.eq.s32.totalorder %s32, 0
      %p163 = por %p161, %p162
      %p164 = scmp.ne.s32.totalorder %s152, %s153
      %p165 = scmp.eq.s32.totalorder %s33, 1
      %p166 = por %p164, %p165
      %p168 = scmp.ne.s32.totalorder %s153, %s167
      %p169 = scmp.eq.s32.totalorder %s33, 0
      %p170 = por %p168, %p169
      %s172 = sadd.s32 %s171, 1
      %p175 = scmp.eq.s32.totalorder %s27, 1
      %p176 = scmp.ne.s32.totalorder %s171, %s173
      %p177 = scmp.eq.s32.totalorder %s27, 0
      %p178 = por %p176, %p177
      %p179 = scmp.ne.s32.totalorder %s171, %s173
      %p180 = scmp.eq.s32.totalorder %s32, 1
      %p181 = por %p179, %p180
      %p182 = scmp.ne.s32.totalorder %s173, %s174
      %p183 = scmp.eq.s32.totalorder %s32, 0
      %p184 = por %p182, %p183
      %p185 = scmp.ne.s32.totalorder %s173, %s174
      %p186 = scmp.eq.s32.totalorder %s33, 1
      %p187 = por %p185, %p186
      %p189 = scmp.ne.s32.totalorder %s174, %s188
      %p190 = scmp.eq.s32.totalorder %s33, 0
      %p191 = por %p189, %p190
      %s193 = sadd.s32 %s192, 1
      %p196 = scmp.eq.s32.totalorder %s27, 1
      %p197 = scmp.ne.s32.totalorder %s192, %s194
      %p198 = scmp.eq.s32.totalorder %s27, 0
      %p199 = por %p197, %p198
      %p200 = scmp.ne.s32.totalorder %s192, %s194
      %p201 = scmp.eq.s32.totalorder %s32, 1
      %p202 = por %p200, %p201
      %p203 = scmp.ne.s32.totalorder %s194, %s195
      %p204 = scmp.eq.s32.totalorder %s32, 0
      %p205 = por %p203, %p204
      %p206 = scmp.ne.s32.totalorder %s194, %s195
      %p207 = scmp.eq.s32.totalorder %s33, 1
      %p208 = por %p206, %p207
      %p210 = scmp.ne.s32.totalorder %s195, %s209
      %p211 = scmp.eq.s32.totalorder %s33, 0
      %p212 = por %p210, %p211
      %s214 = sadd.s32 %s213, 1
      %p217 = scmp.eq.s32.totalorder %s27, 1
      %p218 = scmp.ne.s32.totalorder %s213, %s215
      %p219 = scmp.eq.s32.totalorder %s27, 0
      %p220 = por %p218, %p219
      %p221 = scmp.ne.s32.totalorder %s213, %s215
      %p222 = scmp.eq.s32.totalorder %s32, 1
      %p223 = por %p221, %p222
      %p224 = scmp.ne.s32.totalorder %s215, %s216
      %p225 = scmp.eq.s32.totalorder %s32, 0
      %p226 = por %p224, %p225
      %p227 = scmp.ne.s32.totalorder %s215, %s216
      %p228 = scmp.eq.s32.totalorder %s33, 1
      %p229 = por %p227, %p228
      %p231 = scmp.ne.s32.totalorder %s216, %s230
      %p232 = scmp.eq.s32.totalorder %s33, 0
      %p233 = por %p231, %p232
      %s235 = sadd.s32 %s234, 1
      %p238 = scmp.eq.s32.totalorder %s27, 1
      %p239 = scmp.ne.s32.totalorder %s234, %s236
      %p240 = scmp.eq.s32.totalorder %s27, 0
      %p241 = por %p239, %p240
      %p242 = scmp.ne.s32.totalorder %s234, %s236
      %p243 = scmp.eq.s32.totalorder %s32, 1
      %p244 = por %p242, %p243
      %p245 = scmp.ne.s32.totalorder %s236, %s237
      %p246 = scmp.eq.s32.totalorder %s32, 0
      %p247 = por %p245, %p246
      %p248 = scmp.ne.s32.totalorder %s236, %s237
      %p249 = scmp.eq.s32.totalorder %s33, 1
      %p250 = por %p248, %p249
      %p252 = scmp.ne.s32.totalorder %s237, %s251
      %p253 = scmp.eq.s32.totalorder %s33, 0
      %p254 = por %p252, %p253
      %s255 = ssub.s32 %s27, %s34
      %p256 = scmp.eq.s32.totalorder %s255, 0
      %s258 = sadd.s32 %s257, 1
      %s259 = scalar_select %p256, %s257, %s258
      %p262 = pneg %p256
      %p263 = scmp.eq.s32.totalorder %s27, 1
      %p264 = por %p262, %p263
      %p265 = scmp.ne.s32.totalorder %s257, %s260
      %p266 = scmp.eq.s32.totalorder %s27, 0
      %p267 = por %p265, %p266
      %p268 = scmp.ne.s32.totalorder %s257, %s260
      %p269 = scmp.eq.s32.totalorder %s32, 1
      %p270 = por %p268, %p269
      %p271 = scmp.ne.s32.totalorder %s260, %s261
      %p272 = scmp.eq.s32.totalorder %s32, 0
      %p273 = por %p271, %p272
      %p274 = scmp.ne.s32.totalorder %s260, %s261
      %p275 = scmp.eq.s32.totalorder %s33, 1
      %p276 = por %p274, %p275
      %p278 = scmp.ne.s32.totalorder %s261, %s277
      %p279 = scmp.eq.s32.totalorder %s33, 0
      %p280 = por %p278, %p279
      %p281 = scmp.le.s32.totalorder 1, %s27
      %p282 = scmp.lt.s32.totalorder %s27, 3
      %p283 = pnand %p281, %p282
      %p284 = pneg %p283
      // Predicated region
      $region9: #{tpu_custom_call.1} parent=5 // pred_check
        _
      $region10: #{tpu_custom_call.1} parent=5 // pred_check_branch
        %286 = sbr.rel (%p283) target = $region12
      $region11: #{tpu_custom_call.1} parent=5 // pred_region
        %s287 = ssub.s32 %s27, 1
        // Predicated region
        $region13: #{tpu_custom_call.1} parent=11 // pred_check
          %p288 = pneg %p100
        $region14: #{tpu_custom_call.1} parent=11 // pred_check_branch
          %290 = sbr.rel (%p288) target = $region16
        $region15: #{tpu_custom_call.1} parent=11 // pred_region
          %s292 = ssub.s32 8192, 8192
          %293 = vsyncadd [#allocation6], %s292
          %s294 = sshll.u32 [#allocation7], 4
          %s295 = int_to_ptr.vmem [resolvable:$true] %s294
          %300 = dma.hbm_to_vmem [thread:$0]  %s2, 8192, %s295, [#allocation6], 64, 64, 4
        $region16: #{tpu_custom_call.1} parent=11 // pred_fallthru
          _
        // Predicated region
        $region17: #{tpu_custom_call.1} parent=11 // pred_check
          %p301 = pneg %p121
        $region18: #{tpu_custom_call.1} parent=11 // pred_check_branch
          %303 = sbr.rel (%p301) target = $region20
        $region19: #{tpu_custom_call.1} parent=11 // pred_region
          _
        $region20: #{tpu_custom_call.1} parent=11 // pred_fallthru
          _
        // Predicated region
        $region21: #{tpu_custom_call.1} parent=11 // pred_check
          %p304 = pneg %p142
        $region22: #{tpu_custom_call.1} parent=11 // pred_check_branch
          %306 = sbr.rel (%p304) target = $region24
        $region23: #{tpu_custom_call.1} parent=11 // pred_region
          %s308 = ssub.s32 1024, 1024
          %309 = vsyncadd [#allocation9], %s308
          %s310 = sshll.u32 [#allocation8], 4
          %s311 = int_to_ptr.vmem [resolvable:$true] %s310
          %316 = dma.hbm_to_vmem [thread:$0]  %s4, 1024, %s311, [#allocation9], 64, 64, 4
        $region24: #{tpu_custom_call.1} parent=11 // pred_fallthru
          _
        // Predicated region
        $region25: #{tpu_custom_call.1} parent=11 // pred_check
          %p317 = pneg %p163
        $region26: #{tpu_custom_call.1} parent=11 // pred_check_branch
          %319 = sbr.rel (%p317) target = $region28
        $region27: #{tpu_custom_call.1} parent=11 // pred_region
          _
        $region28: #{tpu_custom_call.1} parent=11 // pred_fallthru
          _
        // Predicated region
        $region29: #{tpu_custom_call.1} parent=11 // pred_check
          %p320 = pneg %p184
        $region30: #{tpu_custom_call.1} parent=11 // pred_check_branch
          %322 = sbr.rel (%p320) target = $region32
        $region31: #{tpu_custom_call.1} parent=11 // pred_region
          %s324 = ssub.s32 1024, 1024
          %325 = vsyncadd [#allocation9], %s324
          %s326 = sshll.u32 [#allocation10], 4
          %s327 = int_to_ptr.vmem [resolvable:$true] %s326
          %332 = dma.hbm_to_vmem [thread:$0]  %s6, 1024, %s327, [#allocation9], 64, 64, 4
        $region32: #{tpu_custom_call.1} parent=11 // pred_fallthru
          _
        // Predicated region
        $region33: #{tpu_custom_call.1} parent=11 // pred_check
          %p333 = pneg %p205
        $region34: #{tpu_custom_call.1} parent=11 // pred_check_branch
          %335 = sbr.rel (%p333) target = $region36
        $region35: #{tpu_custom_call.1} parent=11 // pred_region
          _
        $region36: #{tpu_custom_call.1} parent=11 // pred_fallthru
          _
        // Predicated region
        $region37: #{tpu_custom_call.1} parent=11 // pred_check
          %p336 = pneg %p226
        $region38: #{tpu_custom_call.1} parent=11 // pred_check_branch
          %338 = sbr.rel (%p336) target = $region40
        $region39: #{tpu_custom_call.1} parent=11 // pred_region
          %s340 = ssub.s32 1024, 1024
          %341 = vsyncadd [#allocation12], %s340
          %s342 = sshll.u32 [#allocation11], 4
          %s343 = int_to_ptr.vmem [resolvable:$true] %s342
          %348 = dma.hbm_to_vmem [thread:$0]  %s8, 1024, %s343, [#allocation12], 64, 64, 4
        $region40: #{tpu_custom_call.1} parent=11 // pred_fallthru
          _
        // Predicated region
        $region41: #{tpu_custom_call.1} parent=11 // pred_check
          %p349 = pneg %p247
        $region42: #{tpu_custom_call.1} parent=11 // pred_check_branch
          %351 = sbr.rel (%p349) target = $region44
        $region43: #{tpu_custom_call.1} parent=11 // pred_region
          _
        $region44: #{tpu_custom_call.1} parent=11 // pred_fallthru
          _
      $region12: #{tpu_custom_call.1} parent=5 // pred_fallthru
        _
      %p352 = scmp.lt.s32.totalorder %s27, 2
      // Predicated region
      $region45: #{tpu_custom_call.1} parent=5 // pred_check
        %p353 = pneg %p352
      $region46: #{tpu_custom_call.1} parent=5 // pred_check_branch
        %355 = sbr.rel (%p353) target = $region48
      $region47: #{tpu_custom_call.1} parent=5 // pred_region
        // Predicated region
        $region49: #{tpu_custom_call.1} parent=47 // pred_check
          %p356 = pneg %p47
        $region50: #{tpu_custom_call.1} parent=47 // pred_check_branch
          %358 = sbr.rel (%p356) target = $region52
        $region51: #{tpu_custom_call.1} parent=47 // pred_region
          %s359 = sand.u32 %s37, 1
          %s360 = scalar_lea.sflag [#allocation3], %s359
          %s361 = sand.u32 %s37, 1
          %s362 = smul.addr %s361, 512
          %s363 = scalar_lea.vmem [#allocation2], %s362
          %s364 = smul.u32 16, %s27
          %s366 = ssub.s32 8192, 8192
          %367 = vsyncadd %s360, %s366
          %s368 = smul.addr %s364, 8
          %s369 = smul.addr %s368, 64
          %s370 = scalar_lea.hbm %s0, %s369
          %s371 = sshll.u32 %s363, 4
          %s372 = int_to_ptr.vmem [resolvable:$true] %s371
          %377 = dma.hbm_to_vmem [thread:$0]  %s370, 8192, %s372, %s360, 512, 512, 32
        $region52: #{tpu_custom_call.1} parent=47 // pred_fallthru
          _
        // Predicated region
        $region53: #{tpu_custom_call.1} parent=47 // pred_check
          %p378 = pneg %p73
        $region54: #{tpu_custom_call.1} parent=47 // pred_check_branch
          %380 = sbr.rel (%p378) target = $region56
        $region55: #{tpu_custom_call.1} parent=47 // pred_region
          %s381 = sand.u32 %s27, 1
          %s382 = scalar_lea.sflag [#allocation6], %s381
          %s383 = sand.u32 %s63, 1
          %s384 = smul.addr %s383, 128
          %s385 = scalar_lea.vmem [#allocation5], %s384
          %s386 = smul.u32 16, %s27
          %s388 = ssub.s32 2048, 2048
          %389 = vsyncadd %s382, %s388
          %s390 = smul.addr %s386, 128
          %s391 = scalar_lea.hbm %s1, %s390
          %s392 = sshll.u32 %s385, 4
          %s393 = int_to_ptr.vmem [resolvable:$true] %s392
          %398 = dma.hbm_to_vmem [thread:$0]  %s391, 2048, %s393, %s382, 128, 128, 8
        $region56: #{tpu_custom_call.1} parent=47 // pred_fallthru
          _
      $region48: #{tpu_custom_call.1} parent=5 // pred_fallthru
        _
      %p399 = scmp.le.s32.totalorder 1, %s27
      %p400 = scmp.lt.s32.totalorder %s27, 3
      %p401 = pnand %p399, %p400
      %p402 = pneg %p401
      // Predicated region
      $region57: #{tpu_custom_call.1} parent=5 // pred_check
        _
      $region58: #{tpu_custom_call.1} parent=5 // pred_check_branch
        %404 = sbr.rel (%p401) target = $region60
      $region59: #{tpu_custom_call.1} parent=5 // pred_region
        %s405 = ssub.s32 %s27, 1
        %s406 = sand.u32 %s40, 1
        %s407 = scalar_lea.sflag [#allocation3], %s406
        %s408 = sand.u32 %s40, 1
        %s409 = smul.addr %s408, 512
        %s410 = scalar_lea.vmem [#allocation2], %s409
        // Predicated region
        $region61: #{tpu_custom_call.1} parent=59 // pred_check
          %p411 = pneg %p53
        $region62: #{tpu_custom_call.1} parent=59 // pred_check_branch
          %413 = sbr.rel (%p411) target = $region64
        $region63: #{tpu_custom_call.1} parent=59 // pred_region
          %414 = dma.done %s407, 8192
        $region64: #{tpu_custom_call.1} parent=59 // pred_fallthru
          _
        %s415 = sand.u32 %s32, 1
        %s416 = scalar_lea.sflag [#allocation6], %s415
        %s417 = sand.u32 %s66, 1
        %s418 = smul.addr %s417, 128
        %s419 = scalar_lea.vmem [#allocation5], %s418
        // Predicated region
        $region65: #{tpu_custom_call.1} parent=59 // pred_check
          %p420 = pneg %p79
        $region66: #{tpu_custom_call.1} parent=59 // pred_check_branch
          %422 = sbr.rel (%p420) target = $region68
        $region67: #{tpu_custom_call.1} parent=59 // pred_region
          %423 = dma.done %s416, 2048
        $region68: #{tpu_custom_call.1} parent=59 // pred_fallthru
          _
        // Predicated region
        $region69: #{tpu_custom_call.1} parent=59 // pred_check
          %p424 = pneg %p100
        $region70: #{tpu_custom_call.1} parent=59 // pred_check_branch
          %426 = sbr.rel (%p424) target = $region72
        $region71: #{tpu_custom_call.1} parent=59 // pred_region
          %427 = dma.done [#allocation6], 8192
        $region72: #{tpu_custom_call.1} parent=59 // pred_fallthru
          _
        // Predicated region
        $region73: #{tpu_custom_call.1} parent=59 // pred_check
          %p428 = pneg %p142
        $region74: #{tpu_custom_call.1} parent=59 // pred_check_branch
          %430 = sbr.rel (%p428) target = $region76
        $region75: #{tpu_custom_call.1} parent=59 // pred_region
          %431 = dma.done [#allocation9], 1024
        $region76: #{tpu_custom_call.1} parent=59 // pred_fallthru
          _
        // Predicated region
        $region77: #{tpu_custom_call.1} parent=59 // pred_check
          %p432 = pneg %p184
        $region78: #{tpu_custom_call.1} parent=59 // pred_check_branch
          %434 = sbr.rel (%p432) target = $region80
        $region79: #{tpu_custom_call.1} parent=59 // pred_region
          %435 = dma.done [#allocation9], 1024
        $region80: #{tpu_custom_call.1} parent=59 // pred_fallthru
          _
        // Predicated region
        $region81: #{tpu_custom_call.1} parent=59 // pred_check
          %p436 = pneg %p226
        $region82: #{tpu_custom_call.1} parent=59 // pred_check_branch
          %438 = sbr.rel (%p436) target = $region84
        $region83: #{tpu_custom_call.1} parent=59 // pred_region
          %439 = dma.done [#allocation12], 1024
        $region84: #{tpu_custom_call.1} parent=59 // pred_fallthru
          _
        %s440 = sand.u32 %s40, 1
        %s441 = scalar_lea.sflag [#allocation3], %s440
        %s442 = sand.u32 %s40, 1
        %s443 = smul.addr %s442, 512
        %s444 = scalar_lea.vmem [#allocation2], %s443
        %p445 = pneg %p53
        %p446 = pneg %p50
        %s447 = sand.u32 %s32, 1
        %s448 = scalar_lea.sflag [#allocation6], %s447
        %s449 = sand.u32 %s66, 1
        %s450 = smul.addr %s449, 128
        %s451 = scalar_lea.vmem [#allocation5], %s450
        %p452 = pneg %p79
        %p453 = pneg %p76
        %p454 = pneg %p100
        %p455 = pneg %p97
        %p456 = pneg %p121
        %p457 = pneg %p118
        %p458 = pneg %p142
        %p459 = pneg %p139
        %p460 = pneg %p163
        %p461 = pneg %p160
        %p462 = pneg %p184
        %p463 = pneg %p181
        %p464 = pneg %p205
        %p465 = pneg %p202
        %p466 = pneg %p226
        %p467 = pneg %p223
        %p468 = pneg %p247
        %p469 = pneg %p244
        %p470 = pneg %p273
        %p471 = pneg %p270
        %s472 = sand.u32 %s260, 1
        %s473 = scalar_lea.sflag [#allocation4], %s472
        %s474 = sand.u32 %s260, 1
        %s475 = smul.addr %s474, 128
        %s476 = scalar_lea.vmem [#allocation13], %s475
        %s477 = smul.u32 16, %s32
        %s478 = smul.u32 16, %s32
        %s479 = smul.u32 16, %s32
        %v481 = vld [vmem:[%s410] sm:$0xff]
        %v482 = vld [vmem:[%s410 + $0x8] sm:$0xff]
        %v483 = vld [vmem:[%s410 + $0x10] sm:$0xff]
        %v484 = vld [vmem:[%s410 + $0x18] sm:$0xff]
        %v485 = vld [vmem:[%s410 + $0x20] sm:$0xff]
        %v486 = vld [vmem:[%s410 + $0x28] sm:$0xff]
        %v487 = vld [vmem:[%s410 + $0x30] sm:$0xff]
        %v488 = vld [vmem:[%s410 + $0x38] sm:$0xff]
        %v489 = vld [vmem:[%s410 + $0x40] sm:$0xff]
        %v490 = vld [vmem:[%s410 + $0x48] sm:$0xff]
        %v491 = vld [vmem:[%s410 + $0x50] sm:$0xff]
        %v492 = vld [vmem:[%s410 + $0x58] sm:$0xff]
        %v493 = vld [vmem:[%s410 + $0x60] sm:$0xff]
        %v494 = vld [vmem:[%s410 + $0x68] sm:$0xff]
        %v495 = vld [vmem:[%s410 + $0x70] sm:$0xff]
        %v496 = vld [vmem:[%s410 + $0x78] sm:$0xff]
        %v497 = vld [vmem:[%s410 + $0x80] sm:$0xff]
        %v498 = vld [vmem:[%s410 + $0x88] sm:$0xff]
        %v499 = vld [vmem:[%s410 + $0x90] sm:$0xff]
        %v500 = vld [vmem:[%s410 + $0x98] sm:$0xff]
        %v501 = vld [vmem:[%s410 + $0xa0] sm:$0xff]
        %v502 = vld [vmem:[%s410 + $0xa8] sm:$0xff]
        %v503 = vld [vmem:[%s410 + $0xb0] sm:$0xff]
        %v504 = vld [vmem:[%s410 + $0xb8] sm:$0xff]
        %v505 = vld [vmem:[%s410 + $0xc0] sm:$0xff]
        %v506 = vld [vmem:[%s410 + $0xc8] sm:$0xff]
        %v507 = vld [vmem:[%s410 + $0xd0] sm:$0xff]
        %v508 = vld [vmem:[%s410 + $0xd8] sm:$0xff]
        %v509 = vld [vmem:[%s410 + $0xe0] sm:$0xff]
        %v510 = vld [vmem:[%s410 + $0xe8] sm:$0xff]
        %v511 = vld [vmem:[%s410 + $0xf0] sm:$0xff]
        %v512 = vld [vmem:[%s410 + $0xf8] sm:$0xff]
        %v513 = vld [vmem:[%s410 + $0x100] sm:$0xff]
        %v514 = vld [vmem:[%s410 + $0x108] sm:$0xff]
        %v515 = vld [vmem:[%s410 + $0x110] sm:$0xff]
        %v516 = vld [vmem:[%s410 + $0x118] sm:$0xff]
        %v517 = vld [vmem:[%s410 + $0x120] sm:$0xff]
        %v518 = vld [vmem:[%s410 + $0x128] sm:$0xff]
        %v519 = vld [vmem:[%s410 + $0x130] sm:$0xff]
        %v520 = vld [vmem:[%s410 + $0x138] sm:$0xff]
        %v521 = vld [vmem:[%s410 + $0x140] sm:$0xff]
        %v522 = vld [vmem:[%s410 + $0x148] sm:$0xff]
        %v523 = vld [vmem:[%s410 + $0x150] sm:$0xff]
        %v524 = vld [vmem:[%s410 + $0x158] sm:$0xff]
        %v525 = vld [vmem:[%s410 + $0x160] sm:$0xff]
        %v526 = vld [vmem:[%s410 + $0x168] sm:$0xff]
        %v527 = vld [vmem:[%s410 + $0x170] sm:$0xff]
        %v528 = vld [vmem:[%s410 + $0x178] sm:$0xff]
        %v529 = vld [vmem:[%s410 + $0x180] sm:$0xff]
        %v530 = vld [vmem:[%s410 + $0x188] sm:$0xff]
        %v531 = vld [vmem:[%s410 + $0x190] sm:$0xff]
        %v532 = vld [vmem:[%s410 + $0x198] sm:$0xff]
        %v533 = vld [vmem:[%s410 + $0x1a0] sm:$0xff]
        %v534 = vld [vmem:[%s410 + $0x1a8] sm:$0xff]
        %v535 = vld [vmem:[%s410 + $0x1b0] sm:$0xff]
        %v536 = vld [vmem:[%s410 + $0x1b8] sm:$0xff]
        %v537 = vld [vmem:[%s410 + $0x1c0] sm:$0xff]
        %v538 = vld [vmem:[%s410 + $0x1c8] sm:$0xff]
        %v539 = vld [vmem:[%s410 + $0x1d0] sm:$0xff]
        %v540 = vld [vmem:[%s410 + $0x1d8] sm:$0xff]
        %v541 = vld [vmem:[%s410 + $0x1e0] sm:$0xff]
        %v542 = vld [vmem:[%s410 + $0x1e8] sm:$0xff]
        %v543 = vld [vmem:[%s410 + $0x1f0] sm:$0xff]
        %v544 = vld [vmem:[%s410 + $0x1f8] sm:$0xff]
        %v545 = vld [vmem:[#allocation7] sm:$0xf]
        %v546 = vld [vmem:[#allocation7 + $0x4] sm:$0xf]
        %v547 = vld [vmem:[#allocation7 + $0x8] sm:$0xf]
        %v548 = vld [vmem:[#allocation7 + $0xc] sm:$0xf]
        %v549 = vld [vmem:[#allocation7 + $0x10] sm:$0xf]
        %v550 = vld [vmem:[#allocation7 + $0x14] sm:$0xf]
        %v551 = vld [vmem:[#allocation7 + $0x18] sm:$0xf]
        %v552 = vld [vmem:[#allocation7 + $0x1c] sm:$0xf]
        %v553 = vld [vmem:[#allocation7 + $0x20] sm:$0xf]
        %v554 = vld [vmem:[#allocation7 + $0x24] sm:$0xf]
        %v555 = vld [vmem:[#allocation7 + $0x28] sm:$0xf]
        %v556 = vld [vmem:[#allocation7 + $0x2c] sm:$0xf]
        %v557 = vld [vmem:[#allocation7 + $0x30] sm:$0xf]
        %v558 = vld [vmem:[#allocation7 + $0x34] sm:$0xf]
        %v559 = vld [vmem:[#allocation7 + $0x38] sm:$0xf]
        %v560 = vld [vmem:[#allocation7 + $0x3c] sm:$0xf]
        %v561 = vld [vmem:[#allocation7 + $0x40] sm:$0xf]
        %v562 = vld [vmem:[#allocation7 + $0x44] sm:$0xf]
        %v563 = vld [vmem:[#allocation7 + $0x48] sm:$0xf]
        %v564 = vld [vmem:[#allocation7 + $0x4c] sm:$0xf]
        %v565 = vld [vmem:[#allocation7 + $0x50] sm:$0xf]
        %v566 = vld [vmem:[#allocation7 + $0x54] sm:$0xf]
        %v567 = vld [vmem:[#allocation7 + $0x58] sm:$0xf]
        %v568 = vld [vmem:[#allocation7 + $0x5c] sm:$0xf]
        %v569 = vld [vmem:[#allocation7 + $0x60] sm:$0xf]
        %v570 = vld [vmem:[#allocation7 + $0x64] sm:$0xf]
        %v571 = vld [vmem:[#allocation7 + $0x68] sm:$0xf]
        %v572 = vld [vmem:[#allocation7 + $0x6c] sm:$0xf]
        %v573 = vld [vmem:[#allocation7 + $0x70] sm:$0xf]
        %v574 = vld [vmem:[#allocation7 + $0x74] sm:$0xf]
        %v575 = vld [vmem:[#allocation7 + $0x78] sm:$0xf]
        %v576 = vld [vmem:[#allocation7 + $0x7c] sm:$0xf]
        %v577 = vld [vmem:[#allocation7 + $0x80] sm:$0xf]
        %v578 = vld [vmem:[#allocation7 + $0x84] sm:$0xf]
        %v579 = vld [vmem:[#allocation7 + $0x88] sm:$0xf]
        %v580 = vld [vmem:[#allocation7 + $0x8c] sm:$0xf]
        %v581 = vld [vmem:[#allocation7 + $0x90] sm:$0xf]
        %v582 = vld [vmem:[#allocation7 + $0x94] sm:$0xf]
        %v583 = vld [vmem:[#allocation7 + $0x98] sm:$0xf]
        %v584 = vld [vmem:[#allocation7 + $0x9c] sm:$0xf]
        %v585 = vld [vmem:[#allocation7 + $0xa0] sm:$0xf]
        %v586 = vld [vmem:[#allocation7 + $0xa4] sm:$0xf]
        %v587 = vld [vmem:[#allocation7 + $0xa8] sm:$0xf]
        %v588 = vld [vmem:[#allocation7 + $0xac] sm:$0xf]
        %v589 = vld [vmem:[#allocation7 + $0xb0] sm:$0xf]
        %v590 = vld [vmem:[#allocation7 + $0xb4] sm:$0xf]
        %v591 = vld [vmem:[#allocation7 + $0xb8] sm:$0xf]
        %v592 = vld [vmem:[#allocation7 + $0xbc] sm:$0xf]
        %v593 = vld [vmem:[#allocation7 + $0xc0] sm:$0xf]
        %v594 = vld [vmem:[#allocation7 + $0xc4] sm:$0xf]
        %v595 = vld [vmem:[#allocation7 + $0xc8] sm:$0xf]
        %v596 = vld [vmem:[#allocation7 + $0xcc] sm:$0xf]
        %v597 = vld [vmem:[#allocation7 + $0xd0] sm:$0xf]
        %v598 = vld [vmem:[#allocation7 + $0xd4] sm:$0xf]
        %v599 = vld [vmem:[#allocation7 + $0xd8] sm:$0xf]
        %v600 = vld [vmem:[#allocation7 + $0xdc] sm:$0xf]
        %v601 = vld [vmem:[#allocation7 + $0xe0] sm:$0xf]
        %v602 = vld [vmem:[#allocation7 + $0xe4] sm:$0xf]
        %v603 = vld [vmem:[#allocation7 + $0xe8] sm:$0xf]
        %v604 = vld [vmem:[#allocation7 + $0xec] sm:$0xf]
        %v605 = vld [vmem:[#allocation7 + $0xf0] sm:$0xf]
        %v606 = vld [vmem:[#allocation7 + $0xf4] sm:$0xf]
        %v607 = vld [vmem:[#allocation7 + $0xf8] sm:$0xf]
        %v608 = vld [vmem:[#allocation7 + $0xfc] sm:$0xf]
        %v609 = vld [vmem:[#allocation7 + $0x100] sm:$0xf]
        %v610 = vld [vmem:[#allocation7 + $0x104] sm:$0xf]
        %v611 = vld [vmem:[#allocation7 + $0x108] sm:$0xf]
        %v612 = vld [vmem:[#allocation7 + $0x10c] sm:$0xf]
        %v613 = vld [vmem:[#allocation7 + $0x110] sm:$0xf]
        %v614 = vld [vmem:[#allocation7 + $0x114] sm:$0xf]
        %v615 = vld [vmem:[#allocation7 + $0x118] sm:$0xf]
        %v616 = vld [vmem:[#allocation7 + $0x11c] sm:$0xf]
        %v617 = vld [vmem:[#allocation7 + $0x120] sm:$0xf]
        %v618 = vld [vmem:[#allocation7 + $0x124] sm:$0xf]
        %v619 = vld [vmem:[#allocation7 + $0x128] sm:$0xf]
        %v620 = vld [vmem:[#allocation7 + $0x12c] sm:$0xf]
        %v621 = vld [vmem:[#allocation7 + $0x130] sm:$0xf]
        %v622 = vld [vmem:[#allocation7 + $0x134] sm:$0xf]
        %v623 = vld [vmem:[#allocation7 + $0x138] sm:$0xf]
        %v624 = vld [vmem:[#allocation7 + $0x13c] sm:$0xf]
        %v625 = vld [vmem:[#allocation7 + $0x140] sm:$0xf]
        %v626 = vld [vmem:[#allocation7 + $0x144] sm:$0xf]
        %v627 = vld [vmem:[#allocation7 + $0x148] sm:$0xf]
        %v628 = vld [vmem:[#allocation7 + $0x14c] sm:$0xf]
        %v629 = vld [vmem:[#allocation7 + $0x150] sm:$0xf]
        %v630 = vld [vmem:[#allocation7 + $0x154] sm:$0xf]
        %v631 = vld [vmem:[#allocation7 + $0x158] sm:$0xf]
        %v632 = vld [vmem:[#allocation7 + $0x15c] sm:$0xf]
        %v633 = vld [vmem:[#allocation7 + $0x160] sm:$0xf]
        %v634 = vld [vmem:[#allocation7 + $0x164] sm:$0xf]
        %v635 = vld [vmem:[#allocation7 + $0x168] sm:$0xf]
        %v636 = vld [vmem:[#allocation7 + $0x16c] sm:$0xf]
        %v637 = vld [vmem:[#allocation7 + $0x170] sm:$0xf]
        %v638 = vld [vmem:[#allocation7 + $0x174] sm:$0xf]
        %v639 = vld [vmem:[#allocation7 + $0x178] sm:$0xf]
        %v640 = vld [vmem:[#allocation7 + $0x17c] sm:$0xf]
        %v641 = vld [vmem:[#allocation7 + $0x180] sm:$0xf]
        %v642 = vld [vmem:[#allocation7 + $0x184] sm:$0xf]
        %v643 = vld [vmem:[#allocation7 + $0x188] sm:$0xf]
        %v644 = vld [vmem:[#allocation7 + $0x18c] sm:$0xf]
        %v645 = vld [vmem:[#allocation7 + $0x190] sm:$0xf]
        %v646 = vld [vmem:[#allocation7 + $0x194] sm:$0xf]
        %v647 = vld [vmem:[#allocation7 + $0x198] sm:$0xf]
        %v648 = vld [vmem:[#allocation7 + $0x19c] sm:$0xf]
        %v649 = vld [vmem:[#allocation7 + $0x1a0] sm:$0xf]
        %v650 = vld [vmem:[#allocation7 + $0x1a4] sm:$0xf]
        %v651 = vld [vmem:[#allocation7 + $0x1a8] sm:$0xf]
        %v652 = vld [vmem:[#allocation7 + $0x1ac] sm:$0xf]
        %v653 = vld [vmem:[#allocation7 + $0x1b0] sm:$0xf]
        %v654 = vld [vmem:[#allocation7 + $0x1b4] sm:$0xf]
        %v655 = vld [vmem:[#allocation7 + $0x1b8] sm:$0xf]
        %v656 = vld [vmem:[#allocation7 + $0x1bc] sm:$0xf]
        %v657 = vld [vmem:[#allocation7 + $0x1c0] sm:$0xf]
        %v658 = vld [vmem:[#allocation7 + $0x1c4] sm:$0xf]
        %v659 = vld [vmem:[#allocation7 + $0x1c8] sm:$0xf]
        %v660 = vld [vmem:[#allocation7 + $0x1cc] sm:$0xf]
        %v661 = vld [vmem:[#allocation7 + $0x1d0] sm:$0xf]
        %v662 = vld [vmem:[#allocation7 + $0x1d4] sm:$0xf]
        %v663 = vld [vmem:[#allocation7 + $0x1d8] sm:$0xf]
        %v664 = vld [vmem:[#allocation7 + $0x1dc] sm:$0xf]
        %v665 = vld [vmem:[#allocation7 + $0x1e0] sm:$0xf]
        %v666 = vld [vmem:[#allocation7 + $0x1e4] sm:$0xf]
        %v667 = vld [vmem:[#allocation7 + $0x1e8] sm:$0xf]
        %v668 = vld [vmem:[#allocation7 + $0x1ec] sm:$0xf]
        %v669 = vld [vmem:[#allocation7 + $0x1f0] sm:$0xf]
        %v670 = vld [vmem:[#allocation7 + $0x1f4] sm:$0xf]
        %v671 = vld [vmem:[#allocation7 + $0x1f8] sm:$0xf]
        %v672 = vld [vmem:[#allocation7 + $0x1fc] sm:$0xf]
        %v673 = vld [vmem:[%s3] sm:$0x1]
        %v675 = vlaneseq
        %v676 = vshrl.u32 %v675, 7
        %v677 = vsub.s32 0, %v676
        %v678 = vrot.slane %v673, %v677
        %v744 = vunpack.c.l.b16 %v481
        %v745 = vunpack.c.h.b16 %v481
        %v746 = vunpack.c.l.b16 %v482
        %v747 = vunpack.c.h.b16 %v482
        %v748 = vunpack.c.l.b16 %v483
        %v749 = vunpack.c.h.b16 %v483
        %v750 = vunpack.c.l.b16 %v484
        %v751 = vunpack.c.h.b16 %v484
        %v752 = vunpack.c.l.b16 %v485
        %v753 = vunpack.c.h.b16 %v485
        %v754 = vunpack.c.l.b16 %v486
        %v755 = vunpack.c.h.b16 %v486
        %v756 = vunpack.c.l.b16 %v487
        %v757 = vunpack.c.h.b16 %v487
        %v758 = vunpack.c.l.b16 %v488
        %v759 = vunpack.c.h.b16 %v488
        %v760 = vunpack.c.l.b16 %v489
        %v761 = vunpack.c.h.b16 %v489
        %v762 = vunpack.c.l.b16 %v490
        %v763 = vunpack.c.h.b16 %v490
        %v764 = vunpack.c.l.b16 %v491
        %v765 = vunpack.c.h.b16 %v491
        %v766 = vunpack.c.l.b16 %v492
        %v767 = vunpack.c.h.b16 %v492
        %v768 = vunpack.c.l.b16 %v493
        %v769 = vunpack.c.h.b16 %v493
        %v770 = vunpack.c.l.b16 %v494
        %v771 = vunpack.c.h.b16 %v494
        %v772 = vunpack.c.l.b16 %v495
        %v773 = vunpack.c.h.b16 %v495
        %v774 = vunpack.c.l.b16 %v496
        %v775 = vunpack.c.h.b16 %v496
        %v776 = vunpack.c.l.b16 %v497
        %v777 = vunpack.c.h.b16 %v497
        %v778 = vunpack.c.l.b16 %v498
        %v779 = vunpack.c.h.b16 %v498
        %v780 = vunpack.c.l.b16 %v499
        %v781 = vunpack.c.h.b16 %v499
        %v782 = vunpack.c.l.b16 %v500
        %v783 = vunpack.c.h.b16 %v500
        %v784 = vunpack.c.l.b16 %v501
        %v785 = vunpack.c.h.b16 %v501
        %v786 = vunpack.c.l.b16 %v502
        %v787 = vunpack.c.h.b16 %v502
        %v788 = vunpack.c.l.b16 %v503
        %v789 = vunpack.c.h.b16 %v503
        %v790 = vunpack.c.l.b16 %v504
        %v791 = vunpack.c.h.b16 %v504
        %v792 = vunpack.c.l.b16 %v505
        %v793 = vunpack.c.h.b16 %v505
        %v794 = vunpack.c.l.b16 %v506
        %v795 = vunpack.c.h.b16 %v506
        %v796 = vunpack.c.l.b16 %v507
        %v797 = vunpack.c.h.b16 %v507
        %v798 = vunpack.c.l.b16 %v508
        %v799 = vunpack.c.h.b16 %v508
        %v800 = vunpack.c.l.b16 %v509
        %v801 = vunpack.c.h.b16 %v509
        %v802 = vunpack.c.l.b16 %v510
        %v803 = vunpack.c.h.b16 %v510
        %v804 = vunpack.c.l.b16 %v511
        %v805 = vunpack.c.h.b16 %v511
        %v806 = vunpack.c.l.b16 %v512
        %v807 = vunpack.c.h.b16 %v512
        %v808 = vunpack.c.l.b16 %v513
        %v809 = vunpack.c.h.b16 %v513
        %v810 = vunpack.c.l.b16 %v514
        %v811 = vunpack.c.h.b16 %v514
        %v812 = vunpack.c.l.b16 %v515
        %v813 = vunpack.c.h.b16 %v515
        %v814 = vunpack.c.l.b16 %v516
        %v815 = vunpack.c.h.b16 %v516
        %v816 = vunpack.c.l.b16 %v517
        %v817 = vunpack.c.h.b16 %v517
        %v818 = vunpack.c.l.b16 %v518
        %v819 = vunpack.c.h.b16 %v518
        %v820 = vunpack.c.l.b16 %v519
        %v821 = vunpack.c.h.b16 %v519
        %v822 = vunpack.c.l.b16 %v520
        %v823 = vunpack.c.h.b16 %v520
        %v824 = vunpack.c.l.b16 %v521
        %v825 = vunpack.c.h.b16 %v521
        %v826 = vunpack.c.l.b16 %v522
        %v827 = vunpack.c.h.b16 %v522
        %v828 = vunpack.c.l.b16 %v523
        %v829 = vunpack.c.h.b16 %v523
        %v830 = vunpack.c.l.b16 %v524
        %v831 = vunpack.c.h.b16 %v524
        %v832 = vunpack.c.l.b16 %v525
        %v833 = vunpack.c.h.b16 %v525
        %v834 = vunpack.c.l.b16 %v526
        %v835 = vunpack.c.h.b16 %v526
        %v836 = vunpack.c.l.b16 %v527
        %v837 = vunpack.c.h.b16 %v527
        %v838 = vunpack.c.l.b16 %v528
        %v839 = vunpack.c.h.b16 %v528
        %v840 = vunpack.c.l.b16 %v529
        %v841 = vunpack.c.h.b16 %v529
        %v842 = vunpack.c.l.b16 %v530
        %v843 = vunpack.c.h.b16 %v530
        %v844 = vunpack.c.l.b16 %v531
        %v845 = vunpack.c.h.b16 %v531
        %v846 = vunpack.c.l.b16 %v532
        %v847 = vunpack.c.h.b16 %v532
        %v848 = vunpack.c.l.b16 %v533
        %v849 = vunpack.c.h.b16 %v533
        %v850 = vunpack.c.l.b16 %v534
        %v851 = vunpack.c.h.b16 %v534
        %v852 = vunpack.c.l.b16 %v535
        %v853 = vunpack.c.h.b16 %v535
        %v854 = vunpack.c.l.b16 %v536
        %v855 = vunpack.c.h.b16 %v536
        %v856 = vunpack.c.l.b16 %v537
        %v857 = vunpack.c.h.b16 %v537
        %v858 = vunpack.c.l.b16 %v538
        %v859 = vunpack.c.h.b16 %v538
        %v860 = vunpack.c.l.b16 %v539
        %v861 = vunpack.c.h.b16 %v539
        %v862 = vunpack.c.l.b16 %v540
        %v863 = vunpack.c.h.b16 %v540
        %v864 = vunpack.c.l.b16 %v541
        %v865 = vunpack.c.h.b16 %v541
        %v866 = vunpack.c.l.b16 %v542
        %v867 = vunpack.c.h.b16 %v542
        %v868 = vunpack.c.l.b16 %v543
        %v869 = vunpack.c.h.b16 %v543
        %v870 = vunpack.c.l.b16 %v544
        %v871 = vunpack.c.h.b16 %v544
        %v872 = vpack.c.b16 %v752, %v744
        %v873 = vpack.c.b16 %v753, %v745
        %v874 = vpack.c.b16 %v754, %v746
        %v875 = vpack.c.b16 %v755, %v747
        %v876 = vpack.c.b16 %v756, %v748
        %v877 = vpack.c.b16 %v757, %v749
        %v878 = vpack.c.b16 %v758, %v750
        %v879 = vpack.c.b16 %v759, %v751
        %v880 = vpack.c.b16 %v768, %v760
        %v881 = vpack.c.b16 %v769, %v761
        %v882 = vpack.c.b16 %v770, %v762
        %v883 = vpack.c.b16 %v771, %v763
        %v884 = vpack.c.b16 %v772, %v764
        %v885 = vpack.c.b16 %v773, %v765
        %v886 = vpack.c.b16 %v774, %v766
        %v887 = vpack.c.b16 %v775, %v767
        %v888 = vpack.c.b16 %v784, %v776
        %v889 = vpack.c.b16 %v785, %v777
        %v890 = vpack.c.b16 %v786, %v778
        %v891 = vpack.c.b16 %v787, %v779
        %v892 = vpack.c.b16 %v788, %v780
        %v893 = vpack.c.b16 %v789, %v781
        %v894 = vpack.c.b16 %v790, %v782
        %v895 = vpack.c.b16 %v791, %v783
        %v896 = vpack.c.b16 %v800, %v792
        %v897 = vpack.c.b16 %v801, %v793
        %v898 = vpack.c.b16 %v802, %v794
        %v899 = vpack.c.b16 %v803, %v795
        %v900 = vpack.c.b16 %v804, %v796
        %v901 = vpack.c.b16 %v805, %v797
        %v902 = vpack.c.b16 %v806, %v798
        %v903 = vpack.c.b16 %v807, %v799
        %v904 = vpack.c.b16 %v816, %v808
        %v905 = vpack.c.b16 %v817, %v809
        %v906 = vpack.c.b16 %v818, %v810
        %v907 = vpack.c.b16 %v819, %v811
        %v908 = vpack.c.b16 %v820, %v812
        %v909 = vpack.c.b16 %v821, %v813
        %v910 = vpack.c.b16 %v822, %v814
        %v911 = vpack.c.b16 %v823, %v815
        %v912 = vpack.c.b16 %v832, %v824
        %v913 = vpack.c.b16 %v833, %v825
        %v914 = vpack.c.b16 %v834, %v826
        %v915 = vpack.c.b16 %v835, %v827
        %v916 = vpack.c.b16 %v836, %v828
        %v917 = vpack.c.b16 %v837, %v829
        %v918 = vpack.c.b16 %v838, %v830
        %v919 = vpack.c.b16 %v839, %v831
        %v920 = vpack.c.b16 %v848, %v840
        %v921 = vpack.c.b16 %v849, %v841
        %v922 = vpack.c.b16 %v850, %v842
        %v923 = vpack.c.b16 %v851, %v843
        %v924 = vpack.c.b16 %v852, %v844
        %v925 = vpack.c.b16 %v853, %v845
        %v926 = vpack.c.b16 %v854, %v846
        %v927 = vpack.c.b16 %v855, %v847
        %v928 = vpack.c.b16 %v864, %v856
        %v929 = vpack.c.b16 %v865, %v857
        %v930 = vpack.c.b16 %v866, %v858
        %v931 = vpack.c.b16 %v867, %v859
        %v932 = vpack.c.b16 %v868, %v860
        %v933 = vpack.c.b16 %v869, %v861
        %v934 = vpack.c.b16 %v870, %v862
        %v935 = vpack.c.b16 %v871, %v863
        %v1128 = vunpack.c.l.b16 %v545
        %v1129 = vunpack.c.l.b16 %v546
        %v1130 = vunpack.c.l.b16 %v547
        %v1131 = vunpack.c.l.b16 %v548
        %v1132 = vunpack.c.l.b16 %v549
        %v1133 = vunpack.c.l.b16 %v550
        %v1134 = vunpack.c.l.b16 %v551
        %v1135 = vunpack.c.l.b16 %v552
        %v1136 = vunpack.c.l.b16 %v553
        %v1137 = vunpack.c.l.b16 %v554
        %v1138 = vunpack.c.l.b16 %v555
        %v1139 = vunpack.c.l.b16 %v556
        %v1140 = vunpack.c.l.b16 %v557
        %v1141 = vunpack.c.l.b16 %v558
        %v1142 = vunpack.c.l.b16 %v559
        %v1143 = vunpack.c.l.b16 %v560
        %v1144 = vunpack.c.l.b16 %v561
        %v1145 = vunpack.c.l.b16 %v562
        %v1146 = vunpack.c.l.b16 %v563
        %v1147 = vunpack.c.l.b16 %v564
        %v1148 = vunpack.c.l.b16 %v565
        %v1149 = vunpack.c.l.b16 %v566
        %v1150 = vunpack.c.l.b16 %v567
        %v1151 = vunpack.c.l.b16 %v568
        %v1152 = vunpack.c.l.b16 %v569
        %v1153 = vunpack.c.l.b16 %v570
        %v1154 = vunpack.c.l.b16 %v571
        %v1155 = vunpack.c.l.b16 %v572
        %v1156 = vunpack.c.l.b16 %v573
        %v1157 = vunpack.c.l.b16 %v574
        %v1158 = vunpack.c.l.b16 %v575
        %v1159 = vunpack.c.l.b16 %v576
        %v1160 = vunpack.c.l.b16 %v577
        %v1161 = vunpack.c.l.b16 %v578
        %v1162 = vunpack.c.l.b16 %v579
        %v1163 = vunpack.c.l.b16 %v580
        %v1164 = vunpack.c.l.b16 %v581
        %v1165 = vunpack.c.l.b16 %v582
        %v1166 = vunpack.c.l.b16 %v583
        %v1167 = vunpack.c.l.b16 %v584
        %v1168 = vunpack.c.l.b16 %v585
        %v1169 = vunpack.c.l.b16 %v586
        %v1170 = vunpack.c.l.b16 %v587
        %v1171 = vunpack.c.l.b16 %v588
        %v1172 = vunpack.c.l.b16 %v589
        %v1173 = vunpack.c.l.b16 %v590
        %v1174 = vunpack.c.l.b16 %v591
        %v1175 = vunpack.c.l.b16 %v592
        %v1176 = vunpack.c.l.b16 %v593
        %v1177 = vunpack.c.l.b16 %v594
        %v1178 = vunpack.c.l.b16 %v595
        %v1179 = vunpack.c.l.b16 %v596
        %v1180 = vunpack.c.l.b16 %v597
        %v1181 = vunpack.c.l.b16 %v598
        %v1182 = vunpack.c.l.b16 %v599
        %v1183 = vunpack.c.l.b16 %v600
        %v1184 = vunpack.c.l.b16 %v601
        %v1185 = vunpack.c.l.b16 %v602
        %v1186 = vunpack.c.l.b16 %v603
        %v1187 = vunpack.c.l.b16 %v604
        %v1188 = vunpack.c.l.b16 %v605
        %v1189 = vunpack.c.l.b16 %v606
        %v1190 = vunpack.c.l.b16 %v607
        %v1191 = vunpack.c.l.b16 %v608
        %v1192 = vunpack.c.l.b16 %v609
        %v1193 = vunpack.c.l.b16 %v610
        %v1194 = vunpack.c.l.b16 %v611
        %v1195 = vunpack.c.l.b16 %v612
        %v1196 = vunpack.c.l.b16 %v613
        %v1197 = vunpack.c.l.b16 %v614
        %v1198 = vunpack.c.l.b16 %v615
        %v1199 = vunpack.c.l.b16 %v616
        %v1200 = vunpack.c.l.b16 %v617
        %v1201 = vunpack.c.l.b16 %v618
        %v1202 = vunpack.c.l.b16 %v619
        %v1203 = vunpack.c.l.b16 %v620
        %v1204 = vunpack.c.l.b16 %v621
        %v1205 = vunpack.c.l.b16 %v622
        %v1206 = vunpack.c.l.b16 %v623
        %v1207 = vunpack.c.l.b16 %v624
        %v1208 = vunpack.c.l.b16 %v625
        %v1209 = vunpack.c.l.b16 %v626
        %v1210 = vunpack.c.l.b16 %v627
        %v1211 = vunpack.c.l.b16 %v628
        %v1212 = vunpack.c.l.b16 %v629
        %v1213 = vunpack.c.l.b16 %v630
        %v1214 = vunpack.c.l.b16 %v631
        %v1215 = vunpack.c.l.b16 %v632
        %v1216 = vunpack.c.l.b16 %v633
        %v1217 = vunpack.c.l.b16 %v634
        %v1218 = vunpack.c.l.b16 %v635
        %v1219 = vunpack.c.l.b16 %v636
        %v1220 = vunpack.c.l.b16 %v637
        %v1221 = vunpack.c.l.b16 %v638
        %v1222 = vunpack.c.l.b16 %v639
        %v1223 = vunpack.c.l.b16 %v640
        %v1224 = vunpack.c.l.b16 %v641
        %v1225 = vunpack.c.l.b16 %v642
        %v1226 = vunpack.c.l.b16 %v643
        %v1227 = vunpack.c.l.b16 %v644
        %v1228 = vunpack.c.l.b16 %v645
        %v1229 = vunpack.c.l.b16 %v646
        %v1230 = vunpack.c.l.b16 %v647
        %v1231 = vunpack.c.l.b16 %v648
        %v1232 = vunpack.c.l.b16 %v649
        %v1233 = vunpack.c.l.b16 %v650
        %v1234 = vunpack.c.l.b16 %v651
        %v1235 = vunpack.c.l.b16 %v652
        %v1236 = vunpack.c.l.b16 %v653
        %v1237 = vunpack.c.l.b16 %v654
        %v1238 = vunpack.c.l.b16 %v655
        %v1239 = vunpack.c.l.b16 %v656
        %v1240 = vunpack.c.l.b16 %v657
        %v1241 = vunpack.c.l.b16 %v658
        %v1242 = vunpack.c.l.b16 %v659
        %v1243 = vunpack.c.l.b16 %v660
        %v1244 = vunpack.c.l.b16 %v661
        %v1245 = vunpack.c.l.b16 %v662
        %v1246 = vunpack.c.l.b16 %v663
        %v1247 = vunpack.c.l.b16 %v664
        %v1248 = vunpack.c.l.b16 %v665
        %v1249 = vunpack.c.l.b16 %v666
        %v1250 = vunpack.c.l.b16 %v667
        %v1251 = vunpack.c.l.b16 %v668
        %v1252 = vunpack.c.l.b16 %v669
        %v1253 = vunpack.c.l.b16 %v670
        %v1254 = vunpack.c.l.b16 %v671
        %v1255 = vunpack.c.l.b16 %v672
        %v1256 = vpack.c.b16 %v1129, %v1128
        %v1257 = vpack.c.b16 %v1131, %v1130
        %v1258 = vpack.c.b16 %v1133, %v1132
        %v1259 = vpack.c.b16 %v1135, %v1134
        %v1260 = vpack.c.b16 %v1137, %v1136
        %v1261 = vpack.c.b16 %v1139, %v1138
        %v1262 = vpack.c.b16 %v1141, %v1140
        %v1263 = vpack.c.b16 %v1143, %v1142
        %v1264 = vpack.c.b16 %v1145, %v1144
        %v1265 = vpack.c.b16 %v1147, %v1146
        %v1266 = vpack.c.b16 %v1149, %v1148
        %v1267 = vpack.c.b16 %v1151, %v1150
        %v1268 = vpack.c.b16 %v1153, %v1152
        %v1269 = vpack.c.b16 %v1155, %v1154
        %v1270 = vpack.c.b16 %v1157, %v1156
        %v1271 = vpack.c.b16 %v1159, %v1158
        %v1272 = vpack.c.b16 %v1161, %v1160
        %v1273 = vpack.c.b16 %v1163, %v1162
        %v1274 = vpack.c.b16 %v1165, %v1164
        %v1275 = vpack.c.b16 %v1167, %v1166
        %v1276 = vpack.c.b16 %v1169, %v1168
        %v1277 = vpack.c.b16 %v1171, %v1170
        %v1278 = vpack.c.b16 %v1173, %v1172
        %v1279 = vpack.c.b16 %v1175, %v1174
        %v1280 = vpack.c.b16 %v1177, %v1176
        %v1281 = vpack.c.b16 %v1179, %v1178
        %v1282 = vpack.c.b16 %v1181, %v1180
        %v1283 = vpack.c.b16 %v1183, %v1182
        %v1284 = vpack.c.b16 %v1185, %v1184
        %v1285 = vpack.c.b16 %v1187, %v1186
        %v1286 = vpack.c.b16 %v1189, %v1188
        %v1287 = vpack.c.b16 %v1191, %v1190
        %v1288 = vpack.c.b16 %v1193, %v1192
        %v1289 = vpack.c.b16 %v1195, %v1194
        %v1290 = vpack.c.b16 %v1197, %v1196
        %v1291 = vpack.c.b16 %v1199, %v1198
        %v1292 = vpack.c.b16 %v1201, %v1200
        %v1293 = vpack.c.b16 %v1203, %v1202
        %v1294 = vpack.c.b16 %v1205, %v1204
        %v1295 = vpack.c.b16 %v1207, %v1206
        %v1296 = vpack.c.b16 %v1209, %v1208
        %v1297 = vpack.c.b16 %v1211, %v1210
        %v1298 = vpack.c.b16 %v1213, %v1212
        %v1299 = vpack.c.b16 %v1215, %v1214
        %v1300 = vpack.c.b16 %v1217, %v1216
        %v1301 = vpack.c.b16 %v1219, %v1218
        %v1302 = vpack.c.b16 %v1221, %v1220
        %v1303 = vpack.c.b16 %v1223, %v1222
        %v1304 = vpack.c.b16 %v1225, %v1224
        %v1305 = vpack.c.b16 %v1227, %v1226
        %v1306 = vpack.c.b16 %v1229, %v1228
        %v1307 = vpack.c.b16 %v1231, %v1230
        %v1308 = vpack.c.b16 %v1233, %v1232
        %v1309 = vpack.c.b16 %v1235, %v1234
        %v1310 = vpack.c.b16 %v1237, %v1236
        %v1311 = vpack.c.b16 %v1239, %v1238
        %v1312 = vpack.c.b16 %v1241, %v1240
        %v1313 = vpack.c.b16 %v1243, %v1242
        %v1314 = vpack.c.b16 %v1245, %v1244
        %v1315 = vpack.c.b16 %v1247, %v1246
        %v1316 = vpack.c.b16 %v1249, %v1248
        %v1317 = vpack.c.b16 %v1251, %v1250
        %v1318 = vpack.c.b16 %v1253, %v1252
        %v1319 = vpack.c.b16 %v1255, %v1254
        %1384 = vmatprep.subr.bf16.mxu0 0
        %1385 = vmatpush1.bf16.msra.mxu0 %v1263
        %1386 = vmatprep.subr.bf16.mxu0 0
        %1387 = vmatpush1.bf16.msra.mxu0 %v1262
        %1388 = vmatprep.subr.bf16.mxu0 0
        %1389 = vmatpush1.bf16.msra.mxu0 %v1261
        %1390 = vmatprep.subr.bf16.mxu0 0
        %1391 = vmatpush1.bf16.msra.mxu0 %v1260
        %1392 = vmatprep.subr.bf16.mxu0 0
        %1393 = vmatpush1.bf16.msra.mxu0 %v1259
        %1394 = vmatprep.subr.bf16.mxu0 0
        %1395 = vmatpush1.bf16.msra.mxu0 %v1258
        %1396 = vmatprep.subr.bf16.mxu0 0
        %1397 = vmatpush1.bf16.msra.mxu0 %v1257
        %1398 = vmatprep.subr.bf16.mxu0 0
        %1399 = vmatpush1.bf16.msra.mxu0 %v1256
        %1400 = vmatprep.subr.bf16.mxu0 0
        %1401 = vmatpush2.bf16.msra.mxu0 %v1271
        %1402 = vmatprep.subr.bf16.mxu0 0
        %1403 = vmatpush2.bf16.msra.mxu0 %v1270
        %1404 = vmatprep.subr.bf16.mxu0 0
        %1405 = vmatpush2.bf16.msra.mxu0 %v1269
        %1406 = vmatprep.subr.bf16.mxu0 0
        %1407 = vmatpush2.bf16.msra.mxu0 %v1268
        %1408 = vmatprep.subr.bf16.mxu0 0
        %1409 = vmatpush2.bf16.msra.mxu0 %v1267
        %1410 = vmatprep.subr.bf16.mxu0 0
        %1411 = vmatpush2.bf16.msra.mxu0 %v1266
        %1412 = vmatprep.subr.bf16.mxu0 0
        %1413 = vmatpush2.bf16.msra.mxu0 %v1265
        %1414 = vmatprep.subr.bf16.mxu0 0
        %1415 = vmatpush2.bf16.msra.mxu0 %v1264
        %1416 = vmatprep.mubr.bf16.mxu0 %v873
        %1417 = vmatmul.mubr.bf16.gmra.mxu0 %v872
        %v1418 = vpop.f32.mrf.mxu0
        %v1419 = vadd.f32 %v678, %v1418
        %v1420 = vpop.f32.mrf.mxu0
        %v1421 = vpop.f32.mrf.mxu0
        %v1422 = vadd.f32 %v678, %v1421
        %v1423 = vpop.f32.mrf.mxu0
        %1424 = vmatprep.mubr.bf16.mxu0 %v881
        %1425 = vmatmul.mubr.bf16.gmra.mxu0 %v880
        %v1426 = vpop.f32.mrf.mxu0
        %v1427 = vadd.f32 %v678, %v1426
        %v1428 = vpop.f32.mrf.mxu0
        %v1429 = vpop.f32.mrf.mxu0
        %v1430 = vadd.f32 %v678, %v1429
        %v1431 = vpop.f32.mrf.mxu0
        %1432 = vmatprep.mubr.bf16.mxu0 %v889
        %1433 = vmatmul.mubr.bf16.gmra.mxu0 %v888
        %v1434 = vpop.f32.mrf.mxu0
        %v1435 = vadd.f32 %v678, %v1434
        %v1436 = vpop.f32.mrf.mxu0
        %v1437 = vpop.f32.mrf.mxu0
        %v1438 = vadd.f32 %v678, %v1437
        %v1439 = vpop.f32.mrf.mxu0
        %1440 = vmatprep.mubr.bf16.mxu0 %v897
        %1441 = vmatmul.mubr.bf16.gmra.mxu0 %v896
        %v1442 = vpop.f32.mrf.mxu0
        %v1443 = vadd.f32 %v678, %v1442
        %v1444 = vpop.f32.mrf.mxu0
        %v1445 = vpop.f32.mrf.mxu0
        %v1446 = vadd.f32 %v678, %v1445
        %v1447 = vpop.f32.mrf.mxu0
        %1448 = vmatprep.mubr.bf16.mxu0 %v905
        %1449 = vmatmul.mubr.bf16.gmra.mxu0 %v904
        %v1450 = vpop.f32.mrf.mxu0
        %v1451 = vadd.f32 %v678, %v1450
        %v1452 = vpop.f32.mrf.mxu0
        %v1453 = vpop.f32.mrf.mxu0
        %v1454 = vadd.f32 %v678, %v1453
        %v1455 = vpop.f32.mrf.mxu0
        %1456 = vmatprep.mubr.bf16.mxu0 %v913
        %1457 = vmatmul.mubr.bf16.gmra.mxu0 %v912
        %v1458 = vpop.f32.mrf.mxu0
        %v1459 = vadd.f32 %v678, %v1458
        %v1460 = vpop.f32.mrf.mxu0
        %v1461 = vpop.f32.mrf.mxu0
        %v1462 = vadd.f32 %v678, %v1461
        %v1463 = vpop.f32.mrf.mxu0
        %1464 = vmatprep.mubr.bf16.mxu0 %v921
        %1465 = vmatmul.mubr.bf16.gmra.mxu0 %v920
        %v1466 = vpop.f32.mrf.mxu0
        %v1467 = vadd.f32 %v678, %v1466
        %v1468 = vpop.f32.mrf.mxu0
        %v1469 = vpop.f32.mrf.mxu0
        %v1470 = vadd.f32 %v678, %v1469
        %v1471 = vpop.f32.mrf.mxu0
        %1472 = vmatprep.mubr.bf16.mxu0 %v929
        %1473 = vmatmul.mubr.bf16.gmra.mxu0 %v928
        %v1474 = vpop.f32.mrf.mxu0
        %v1475 = vadd.f32 %v678, %v1474
        %v1476 = vpop.f32.mrf.mxu0
        %v1477 = vpop.f32.mrf.mxu0
        %v1478 = vadd.f32 %v678, %v1477
        %v1479 = vpop.f32.mrf.mxu0
        %1480 = vdwg.mxu0
        %1481 = vmatprep.subr.bf16.mxu0 0
        %1482 = vmatpush1.bf16.msra.mxu0 %v1279
        %1483 = vmatprep.subr.bf16.mxu0 0
        %1484 = vmatpush1.bf16.msra.mxu0 %v1278
        %1485 = vmatprep.subr.bf16.mxu0 0
        %1486 = vmatpush1.bf16.msra.mxu0 %v1277
        %1487 = vmatprep.subr.bf16.mxu0 0
        %1488 = vmatpush1.bf16.msra.mxu0 %v1276
        %1489 = vmatprep.subr.bf16.mxu0 0
        %1490 = vmatpush1.bf16.msra.mxu0 %v1275
        %1491 = vmatprep.subr.bf16.mxu0 0
        %1492 = vmatpush1.bf16.msra.mxu0 %v1274
        %1493 = vmatprep.subr.bf16.mxu0 0
        %1494 = vmatpush1.bf16.msra.mxu0 %v1273
        %1495 = vmatprep.subr.bf16.mxu0 0
        %1496 = vmatpush1.bf16.msra.mxu0 %v1272
        %1497 = vmatprep.subr.bf16.mxu0 0
        %1498 = vmatpush2.bf16.msra.mxu0 %v1287
        %1499 = vmatprep.subr.bf16.mxu0 0
        %1500 = vmatpush2.bf16.msra.mxu0 %v1286
        %1501 = vmatprep.subr.bf16.mxu0 0
        %1502 = vmatpush2.bf16.msra.mxu0 %v1285
        %1503 = vmatprep.subr.bf16.mxu0 0
        %1504 = vmatpush2.bf16.msra.mxu0 %v1284
        %1505 = vmatprep.subr.bf16.mxu0 0
        %1506 = vmatpush2.bf16.msra.mxu0 %v1283
        %1507 = vmatprep.subr.bf16.mxu0 0
        %1508 = vmatpush2.bf16.msra.mxu0 %v1282
        %1509 = vmatprep.subr.bf16.mxu0 0
        %1510 = vmatpush2.bf16.msra.mxu0 %v1281
        %1511 = vmatprep.subr.bf16.mxu0 0
        %1512 = vmatpush2.bf16.msra.mxu0 %v1280
        %1513 = vmatprep.mubr.bf16.mxu0 %v875
        %1514 = vmatmul.mubr.bf16.gmra.mxu0 %v874
        %v1515 = vpop.f32.mrf.mxu0
        %v1516 = vadd.f32 %v1419, %v1515
        %v1517 = vpop.f32.mrf.mxu0
        %v1518 = vpop.f32.mrf.mxu0
        %v1519 = vadd.f32 %v1422, %v1518
        %v1520 = vpop.f32.mrf.mxu0
        %1521 = vmatprep.mubr.bf16.mxu0 %v883
        %1522 = vmatmul.mubr.bf16.gmra.mxu0 %v882
        %v1523 = vpop.f32.mrf.mxu0
        %v1524 = vadd.f32 %v1427, %v1523
        %v1525 = vpop.f32.mrf.mxu0
        %v1526 = vpop.f32.mrf.mxu0
        %v1527 = vadd.f32 %v1430, %v1526
        %v1528 = vpop.f32.mrf.mxu0
        %1529 = vmatprep.mubr.bf16.mxu0 %v891
        %1530 = vmatmul.mubr.bf16.gmra.mxu0 %v890
        %v1531 = vpop.f32.mrf.mxu0
        %v1532 = vadd.f32 %v1435, %v1531
        %v1533 = vpop.f32.mrf.mxu0
        %v1534 = vpop.f32.mrf.mxu0
        %v1535 = vadd.f32 %v1438, %v1534
        %v1536 = vpop.f32.mrf.mxu0
        %1537 = vmatprep.mubr.bf16.mxu0 %v899
        %1538 = vmatmul.mubr.bf16.gmra.mxu0 %v898
        %v1539 = vpop.f32.mrf.mxu0
        %v1540 = vadd.f32 %v1443, %v1539
        %v1541 = vpop.f32.mrf.mxu0
        %v1542 = vpop.f32.mrf.mxu0
        %v1543 = vadd.f32 %v1446, %v1542
        %v1544 = vpop.f32.mrf.mxu0
        %1545 = vmatprep.mubr.bf16.mxu0 %v907
        %1546 = vmatmul.mubr.bf16.gmra.mxu0 %v906
        %v1547 = vpop.f32.mrf.mxu0
        %v1548 = vadd.f32 %v1451, %v1547
        %v1549 = vpop.f32.mrf.mxu0
        %v1550 = vpop.f32.mrf.mxu0
        %v1551 = vadd.f32 %v1454, %v1550
        %v1552 = vpop.f32.mrf.mxu0
        %1553 = vmatprep.mubr.bf16.mxu0 %v915
        %1554 = vmatmul.mubr.bf16.gmra.mxu0 %v914
        %v1555 = vpop.f32.mrf.mxu0
        %v1556 = vadd.f32 %v1459, %v1555
        %v1557 = vpop.f32.mrf.mxu0
        %v1558 = vpop.f32.mrf.mxu0
        %v1559 = vadd.f32 %v1462, %v1558
        %v1560 = vpop.f32.mrf.mxu0
        %1561 = vmatprep.mubr.bf16.mxu0 %v923
        %1562 = vmatmul.mubr.bf16.gmra.mxu0 %v922
        %v1563 = vpop.f32.mrf.mxu0
        %v1564 = vadd.f32 %v1467, %v1563
        %v1565 = vpop.f32.mrf.mxu0
        %v1566 = vpop.f32.mrf.mxu0
        %v1567 = vadd.f32 %v1470, %v1566
        %v1568 = vpop.f32.mrf.mxu0
        %1569 = vmatprep.mubr.bf16.mxu0 %v931
        %1570 = vmatmul.mubr.bf16.gmra.mxu0 %v930
        %v1571 = vpop.f32.mrf.mxu0
        %v1572 = vadd.f32 %v1475, %v1571
        %v1573 = vpop.f32.mrf.mxu0
        %v1574 = vpop.f32.mrf.mxu0
        %v1575 = vadd.f32 %v1478, %v1574
        %v1576 = vpop.f32.mrf.mxu0
        %1577 = vdwg.mxu0
        %1578 = vmatprep.subr.bf16.mxu0 0
        %1579 = vmatpush1.bf16.msra.mxu0 %v1295
        %1580 = vmatprep.subr.bf16.mxu0 0
        %1581 = vmatpush1.bf16.msra.mxu0 %v1294
        %1582 = vmatprep.subr.bf16.mxu0 0
        %1583 = vmatpush1.bf16.msra.mxu0 %v1293
        %1584 = vmatprep.subr.bf16.mxu0 0
        %1585 = vmatpush1.bf16.msra.mxu0 %v1292
        %1586 = vmatprep.subr.bf16.mxu0 0
        %1587 = vmatpush1.bf16.msra.mxu0 %v1291
        %1588 = vmatprep.subr.bf16.mxu0 0
        %1589 = vmatpush1.bf16.msra.mxu0 %v1290
        %1590 = vmatprep.subr.bf16.mxu0 0
        %1591 = vmatpush1.bf16.msra.mxu0 %v1289
        %1592 = vmatprep.subr.bf16.mxu0 0
        %1593 = vmatpush1.bf16.msra.mxu0 %v1288
        %1594 = vmatprep.subr.bf16.mxu0 0
        %1595 = vmatpush2.bf16.msra.mxu0 %v1303
        %1596 = vmatprep.subr.bf16.mxu0 0
        %1597 = vmatpush2.bf16.msra.mxu0 %v1302
        %1598 = vmatprep.subr.bf16.mxu0 0
        %1599 = vmatpush2.bf16.msra.mxu0 %v1301
        %1600 = vmatprep.subr.bf16.mxu0 0
        %1601 = vmatpush2.bf16.msra.mxu0 %v1300
        %1602 = vmatprep.subr.bf16.mxu0 0
        %1603 = vmatpush2.bf16.msra.mxu0 %v1299
        %1604 = vmatprep.subr.bf16.mxu0 0
        %1605 = vmatpush2.bf16.msra.mxu0 %v1298
        %1606 = vmatprep.subr.bf16.mxu0 0
        %1607 = vmatpush2.bf16.msra.mxu0 %v1297
        %1608 = vmatprep.subr.bf16.mxu0 0
        %1609 = vmatpush2.bf16.msra.mxu0 %v1296
        %1610 = vmatprep.mubr.bf16.mxu0 %v877
        %1611 = vmatmul.mubr.bf16.gmra.mxu0 %v876
        %v1612 = vpop.f32.mrf.mxu0
        %v1613 = vadd.f32 %v1516, %v1612
        %v1614 = vpop.f32.mrf.mxu0
        %v1615 = vpop.f32.mrf.mxu0
        %v1616 = vadd.f32 %v1519, %v1615
        %v1617 = vpop.f32.mrf.mxu0
        %1618 = vmatprep.mubr.bf16.mxu0 %v885
        %1619 = vmatmul.mubr.bf16.gmra.mxu0 %v884
        %v1620 = vpop.f32.mrf.mxu0
        %v1621 = vadd.f32 %v1524, %v1620
        %v1622 = vpop.f32.mrf.mxu0
        %v1623 = vpop.f32.mrf.mxu0
        %v1624 = vadd.f32 %v1527, %v1623
        %v1625 = vpop.f32.mrf.mxu0
        %1626 = vmatprep.mubr.bf16.mxu0 %v893
        %1627 = vmatmul.mubr.bf16.gmra.mxu0 %v892
        %v1628 = vpop.f32.mrf.mxu0
        %v1629 = vadd.f32 %v1532, %v1628
        %v1630 = vpop.f32.mrf.mxu0
        %v1631 = vpop.f32.mrf.mxu0
        %v1632 = vadd.f32 %v1535, %v1631
        %v1633 = vpop.f32.mrf.mxu0
        %1634 = vmatprep.mubr.bf16.mxu0 %v901
        %1635 = vmatmul.mubr.bf16.gmra.mxu0 %v900
        %v1636 = vpop.f32.mrf.mxu0
        %v1637 = vadd.f32 %v1540, %v1636
        %v1638 = vpop.f32.mrf.mxu0
        %v1639 = vpop.f32.mrf.mxu0
        %v1640 = vadd.f32 %v1543, %v1639
        %v1641 = vpop.f32.mrf.mxu0
        %1642 = vmatprep.mubr.bf16.mxu0 %v909
        %1643 = vmatmul.mubr.bf16.gmra.mxu0 %v908
        %v1644 = vpop.f32.mrf.mxu0
        %v1645 = vadd.f32 %v1548, %v1644
        %v1646 = vpop.f32.mrf.mxu0
        %v1647 = vpop.f32.mrf.mxu0
        %v1648 = vadd.f32 %v1551, %v1647
        %v1649 = vpop.f32.mrf.mxu0
        %1650 = vmatprep.mubr.bf16.mxu0 %v917
        %1651 = vmatmul.mubr.bf16.gmra.mxu0 %v916
        %v1652 = vpop.f32.mrf.mxu0
        %v1653 = vadd.f32 %v1556, %v1652
        %v1654 = vpop.f32.mrf.mxu0
        %v1655 = vpop.f32.mrf.mxu0
        %v1656 = vadd.f32 %v1559, %v1655
        %v1657 = vpop.f32.mrf.mxu0
        %1658 = vmatprep.mubr.bf16.mxu0 %v925
        %1659 = vmatmul.mubr.bf16.gmra.mxu0 %v924
        %v1660 = vpop.f32.mrf.mxu0
        %v1661 = vadd.f32 %v1564, %v1660
        %v1662 = vpop.f32.mrf.mxu0
        %v1663 = vpop.f32.mrf.mxu0
        %v1664 = vadd.f32 %v1567, %v1663
        %v1665 = vpop.f32.mrf.mxu0
        %1666 = vmatprep.mubr.bf16.mxu0 %v933
        %1667 = vmatmul.mubr.bf16.gmra.mxu0 %v932
        %v1668 = vpop.f32.mrf.mxu0
        %v1669 = vadd.f32 %v1572, %v1668
        %v1670 = vpop.f32.mrf.mxu0
        %v1671 = vpop.f32.mrf.mxu0
        %v1672 = vadd.f32 %v1575, %v1671
        %v1673 = vpop.f32.mrf.mxu0
        %1674 = vdwg.mxu0
        %1675 = vmatprep.subr.bf16.mxu0 0
        %1676 = vmatpush1.bf16.msra.mxu0 %v1311
        %1677 = vmatprep.subr.bf16.mxu0 0
        %1678 = vmatpush1.bf16.msra.mxu0 %v1310
        %1679 = vmatprep.subr.bf16.mxu0 0
        %1680 = vmatpush1.bf16.msra.mxu0 %v1309
        %1681 = vmatprep.subr.bf16.mxu0 0
        %1682 = vmatpush1.bf16.msra.mxu0 %v1308
        %1683 = vmatprep.subr.bf16.mxu0 0
        %1684 = vmatpush1.bf16.msra.mxu0 %v1307
        %1685 = vmatprep.subr.bf16.mxu0 0
        %1686 = vmatpush1.bf16.msra.mxu0 %v1306
        %1687 = vmatprep.subr.bf16.mxu0 0
        %1688 = vmatpush1.bf16.msra.mxu0 %v1305
        %1689 = vmatprep.subr.bf16.mxu0 0
        %1690 = vmatpush1.bf16.msra.mxu0 %v1304
        %1691 = vmatprep.subr.bf16.mxu0 0
        %1692 = vmatpush2.bf16.msra.mxu0 %v1319
        %1693 = vmatprep.subr.bf16.mxu0 0
        %1694 = vmatpush2.bf16.msra.mxu0 %v1318
        %1695 = vmatprep.subr.bf16.mxu0 0
        %1696 = vmatpush2.bf16.msra.mxu0 %v1317
        %1697 = vmatprep.subr.bf16.mxu0 0
        %1698 = vmatpush2.bf16.msra.mxu0 %v1316
        %1699 = vmatprep.subr.bf16.mxu0 0
        %1700 = vmatpush2.bf16.msra.mxu0 %v1315
        %1701 = vmatprep.subr.bf16.mxu0 0
        %1702 = vmatpush2.bf16.msra.mxu0 %v1314
        %1703 = vmatprep.subr.bf16.mxu0 0
        %1704 = vmatpush2.bf16.msra.mxu0 %v1313
        %1705 = vmatprep.subr.bf16.mxu0 0
        %1706 = vmatpush2.bf16.msra.mxu0 %v1312
        %1707 = vmatprep.mubr.bf16.mxu0 %v879
        %1708 = vmatmul.mubr.bf16.gmra.mxu0 %v878
        %v1709 = vpop.f32.mrf.mxu0
        %v1710 = vadd.f32 %v1613, %v1709
        %v1711 = vpop.f32.mrf.mxu0
        %v1712 = vpop.f32.mrf.mxu0
        %v1713 = vadd.f32 %v1616, %v1712
        %v1714 = vpop.f32.mrf.mxu0
        %1715 = vmatprep.mubr.bf16.mxu0 %v887
        %1716 = vmatmul.mubr.bf16.gmra.mxu0 %v886
        %v1717 = vpop.f32.mrf.mxu0
        %v1718 = vadd.f32 %v1621, %v1717
        %v1719 = vpop.f32.mrf.mxu0
        %v1720 = vpop.f32.mrf.mxu0
        %v1721 = vadd.f32 %v1624, %v1720
        %v1722 = vpop.f32.mrf.mxu0
        %1723 = vmatprep.mubr.bf16.mxu0 %v895
        %1724 = vmatmul.mubr.bf16.gmra.mxu0 %v894
        %v1725 = vpop.f32.mrf.mxu0
        %v1726 = vadd.f32 %v1629, %v1725
        %v1727 = vpop.f32.mrf.mxu0
        %v1728 = vpop.f32.mrf.mxu0
        %v1729 = vadd.f32 %v1632, %v1728
        %v1730 = vpop.f32.mrf.mxu0
        %1731 = vmatprep.mubr.bf16.mxu0 %v903
        %1732 = vmatmul.mubr.bf16.gmra.mxu0 %v902
        %v1733 = vpop.f32.mrf.mxu0
        %v1734 = vadd.f32 %v1637, %v1733
        %v1735 = vpop.f32.mrf.mxu0
        %v1736 = vpop.f32.mrf.mxu0
        %v1737 = vadd.f32 %v1640, %v1736
        %v1738 = vpop.f32.mrf.mxu0
        %1739 = vmatprep.mubr.bf16.mxu0 %v911
        %1740 = vmatmul.mubr.bf16.gmra.mxu0 %v910
        %v1741 = vpop.f32.mrf.mxu0
        %v1742 = vadd.f32 %v1645, %v1741
        %v1743 = vpop.f32.mrf.mxu0
        %v1744 = vpop.f32.mrf.mxu0
        %v1745 = vadd.f32 %v1648, %v1744
        %v1746 = vpop.f32.mrf.mxu0
        %1747 = vmatprep.mubr.bf16.mxu0 %v919
        %1748 = vmatmul.mubr.bf16.gmra.mxu0 %v918
        %v1749 = vpop.f32.mrf.mxu0
        %v1750 = vadd.f32 %v1653, %v1749
        %v1751 = vpop.f32.mrf.mxu0
        %v1752 = vpop.f32.mrf.mxu0
        %v1753 = vadd.f32 %v1656, %v1752
        %v1754 = vpop.f32.mrf.mxu0
        %1755 = vmatprep.mubr.bf16.mxu0 %v927
        %1756 = vmatmul.mubr.bf16.gmra.mxu0 %v926
        %v1757 = vpop.f32.mrf.mxu0
        %v1758 = vadd.f32 %v1661, %v1757
        %v1759 = vpop.f32.mrf.mxu0
        %v1760 = vpop.f32.mrf.mxu0
        %v1761 = vadd.f32 %v1664, %v1760
        %v1762 = vpop.f32.mrf.mxu0
        %1763 = vmatprep.mubr.bf16.mxu0 %v935
        %1764 = vmatmul.mubr.bf16.gmra.mxu0 %v934
        %v1765 = vpop.f32.mrf.mxu0
        %v1766 = vadd.f32 %v1669, %v1765
        %v1767 = vpop.f32.mrf.mxu0
        %v1768 = vpop.f32.mrf.mxu0
        %v1769 = vadd.f32 %v1672, %v1768
        %v1770 = vpop.f32.mrf.mxu0
        %1771 = vdwg.mxu0
        %v1772 = vmax.f32 %v1710, 0.0
        %v1773 = vmax.f32 %v1713, 0.0
        %v1774 = vmax.f32 %v1718, 0.0
        %v1775 = vmax.f32 %v1721, 0.0
        %v1776 = vmax.f32 %v1726, 0.0
        %v1777 = vmax.f32 %v1729, 0.0
        %v1778 = vmax.f32 %v1734, 0.0
        %v1779 = vmax.f32 %v1737, 0.0
        %v1780 = vmax.f32 %v1742, 0.0
        %v1781 = vmax.f32 %v1745, 0.0
        %v1782 = vmax.f32 %v1750, 0.0
        %v1783 = vmax.f32 %v1753, 0.0
        %v1784 = vmax.f32 %v1758, 0.0
        %v1785 = vmax.f32 %v1761, 0.0
        %v1786 = vmax.f32 %v1766, 0.0
        %v1787 = vmax.f32 %v1769, 0.0
        %v1788 = vpack.c.bf16 %v1773, %v1772
        %v1789 = vpack.c.bf16 %v1775, %v1774
        %v1790 = vpack.c.bf16 %v1777, %v1776
        %v1791 = vpack.c.bf16 %v1779, %v1778
        %v1792 = vpack.c.bf16 %v1781, %v1780
        %v1793 = vpack.c.bf16 %v1783, %v1782
        %v1794 = vpack.c.bf16 %v1785, %v1784
        %v1795 = vpack.c.bf16 %v1787, %v1786
        %v1796 = vld [vmem:[#allocation8] sm:$0xf]
        %v1797 = vld [vmem:[#allocation8 + $0x4] sm:$0xf]
        %v1798 = vld [vmem:[#allocation8 + $0x8] sm:$0xf]
        %v1799 = vld [vmem:[#allocation8 + $0xc] sm:$0xf]
        %v1800 = vld [vmem:[#allocation8 + $0x10] sm:$0xf]
        %v1801 = vld [vmem:[#allocation8 + $0x14] sm:$0xf]
        %v1802 = vld [vmem:[#allocation8 + $0x18] sm:$0xf]
        %v1803 = vld [vmem:[#allocation8 + $0x1c] sm:$0xf]
        %v1804 = vld [vmem:[#allocation8 + $0x20] sm:$0xf]
        %v1805 = vld [vmem:[#allocation8 + $0x24] sm:$0xf]
        %v1806 = vld [vmem:[#allocation8 + $0x28] sm:$0xf]
        %v1807 = vld [vmem:[#allocation8 + $0x2c] sm:$0xf]
        %v1808 = vld [vmem:[#allocation8 + $0x30] sm:$0xf]
        %v1809 = vld [vmem:[#allocation8 + $0x34] sm:$0xf]
        %v1810 = vld [vmem:[#allocation8 + $0x38] sm:$0xf]
        %v1811 = vld [vmem:[#allocation8 + $0x3c] sm:$0xf]
        %v1812 = vld [vmem:[%s5] sm:$0x1]
        %v1814 = vlaneseq
        %v1815 = vshrl.u32 %v1814, 7
        %v1816 = vsub.s32 0, %v1815
        %v1817 = vrot.slane %v1812, %v1816
        %v1835 = vunpack.c.l.b16 %v1796
        %v1836 = vunpack.c.l.b16 %v1797
        %v1837 = vunpack.c.l.b16 %v1798
        %v1838 = vunpack.c.l.b16 %v1799
        %v1839 = vunpack.c.l.b16 %v1800
        %v1840 = vunpack.c.l.b16 %v1801
        %v1841 = vunpack.c.l.b16 %v1802
        %v1842 = vunpack.c.l.b16 %v1803
        %v1843 = vunpack.c.l.b16 %v1804
        %v1844 = vunpack.c.l.b16 %v1805
        %v1845 = vunpack.c.l.b16 %v1806
        %v1846 = vunpack.c.l.b16 %v1807
        %v1847 = vunpack.c.l.b16 %v1808
        %v1848 = vunpack.c.l.b16 %v1809
        %v1849 = vunpack.c.l.b16 %v1810
        %v1850 = vunpack.c.l.b16 %v1811
        %v1851 = vpack.c.b16 %v1836, %v1835
        %v1852 = vpack.c.b16 %v1838, %v1837
        %v1853 = vpack.c.b16 %v1840, %v1839
        %v1854 = vpack.c.b16 %v1842, %v1841
        %v1855 = vpack.c.b16 %v1844, %v1843
        %v1856 = vpack.c.b16 %v1846, %v1845
        %v1857 = vpack.c.b16 %v1848, %v1847
        %v1858 = vpack.c.b16 %v1850, %v1849
        %1867 = vmatprep.subr.bf16.mxu0 0
        %1868 = vmatpush1.bf16.msra.mxu0 %v1858
        %1869 = vmatprep.subr.bf16.mxu0 0
        %1870 = vmatpush1.bf16.msra.mxu0 %v1857
        %1871 = vmatprep.subr.bf16.mxu0 0
        %1872 = vmatpush1.bf16.msra.mxu0 %v1856
        %1873 = vmatprep.subr.bf16.mxu0 0
        %1874 = vmatpush1.bf16.msra.mxu0 %v1855
        %1875 = vmatprep.subr.bf16.mxu0 0
        %1876 = vmatpush1.bf16.msra.mxu0 %v1854
        %1877 = vmatprep.subr.bf16.mxu0 0
        %1878 = vmatpush1.bf16.msra.mxu0 %v1853
        %1879 = vmatprep.subr.bf16.mxu0 0
        %1880 = vmatpush1.bf16.msra.mxu0 %v1852
        %1881 = vmatprep.subr.bf16.mxu0 0
        %1882 = vmatpush1.bf16.msra.mxu0 %v1851
        %1883 = vmatprep.subr.bf16.mxu0 0
        %1884 = vmatpush2.bf16.msra.mxu0 0
        %1885 = vmatprep.subr.bf16.mxu0 0
        %1886 = vmatpush2.bf16.msra.mxu0 0
        %1887 = vmatprep.subr.bf16.mxu0 0
        %1888 = vmatpush2.bf16.msra.mxu0 0
        %1889 = vmatprep.subr.bf16.mxu0 0
        %1890 = vmatpush2.bf16.msra.mxu0 0
        %1891 = vmatprep.subr.bf16.mxu0 0
        %1892 = vmatpush2.bf16.msra.mxu0 0
        %1893 = vmatprep.subr.bf16.mxu0 0
        %1894 = vmatpush2.bf16.msra.mxu0 0
        %1895 = vmatprep.subr.bf16.mxu0 0
        %1896 = vmatpush2.bf16.msra.mxu0 0
        %1897 = vmatprep.subr.bf16.mxu0 0
        %1898 = vmatpush2.bf16.msra.mxu0 0
        %1899 = vmatprep.mubr.bf16.mxu0 0
        %1900 = vmatmul.mubr.bf16.gmra.mxu0 %v1788
        %v1901 = vpop.f32.mrf.mxu0
        %v1902 = vadd.f32 %v1817, %v1901
        %v1903 = vpop.f32.mrf.mxu0
        %v1904 = vpop.f32.mrf.mxu0
        %v1905 = vadd.f32 %v1817, %v1904
        %v1906 = vpop.f32.mrf.mxu0
        %1907 = vmatprep.mubr.bf16.mxu0 0
        %1908 = vmatmul.mubr.bf16.gmra.mxu0 %v1789
        %v1909 = vpop.f32.mrf.mxu0
        %v1910 = vadd.f32 %v1817, %v1909
        %v1911 = vpop.f32.mrf.mxu0
        %v1912 = vpop.f32.mrf.mxu0
        %v1913 = vadd.f32 %v1817, %v1912
        %v1914 = vpop.f32.mrf.mxu0
        %1915 = vmatprep.mubr.bf16.mxu0 0
        %1916 = vmatmul.mubr.bf16.gmra.mxu0 %v1790
        %v1917 = vpop.f32.mrf.mxu0
        %v1918 = vadd.f32 %v1817, %v1917
        %v1919 = vpop.f32.mrf.mxu0
        %v1920 = vpop.f32.mrf.mxu0
        %v1921 = vadd.f32 %v1817, %v1920
        %v1922 = vpop.f32.mrf.mxu0
        %1923 = vmatprep.mubr.bf16.mxu0 0
        %1924 = vmatmul.mubr.bf16.gmra.mxu0 %v1791
        %v1925 = vpop.f32.mrf.mxu0
        %v1926 = vadd.f32 %v1817, %v1925
        %v1927 = vpop.f32.mrf.mxu0
        %v1928 = vpop.f32.mrf.mxu0
        %v1929 = vadd.f32 %v1817, %v1928
        %v1930 = vpop.f32.mrf.mxu0
        %1931 = vmatprep.mubr.bf16.mxu0 0
        %1932 = vmatmul.mubr.bf16.gmra.mxu0 %v1792
        %v1933 = vpop.f32.mrf.mxu0
        %v1934 = vadd.f32 %v1817, %v1933
        %v1935 = vpop.f32.mrf.mxu0
        %v1936 = vpop.f32.mrf.mxu0
        %v1937 = vadd.f32 %v1817, %v1936
        %v1938 = vpop.f32.mrf.mxu0
        %1939 = vmatprep.mubr.bf16.mxu0 0
        %1940 = vmatmul.mubr.bf16.gmra.mxu0 %v1793
        %v1941 = vpop.f32.mrf.mxu0
        %v1942 = vadd.f32 %v1817, %v1941
        %v1943 = vpop.f32.mrf.mxu0
        %v1944 = vpop.f32.mrf.mxu0
        %v1945 = vadd.f32 %v1817, %v1944
        %v1946 = vpop.f32.mrf.mxu0
        %1947 = vmatprep.mubr.bf16.mxu0 0
        %1948 = vmatmul.mubr.bf16.gmra.mxu0 %v1794
        %v1949 = vpop.f32.mrf.mxu0
        %v1950 = vadd.f32 %v1817, %v1949
        %v1951 = vpop.f32.mrf.mxu0
        %v1952 = vpop.f32.mrf.mxu0
        %v1953 = vadd.f32 %v1817, %v1952
        %v1954 = vpop.f32.mrf.mxu0
        %1955 = vmatprep.mubr.bf16.mxu0 0
        %1956 = vmatmul.mubr.bf16.gmra.mxu0 %v1795
        %v1957 = vpop.f32.mrf.mxu0
        %v1958 = vadd.f32 %v1817, %v1957
        %v1959 = vpop.f32.mrf.mxu0
        %v1960 = vpop.f32.mrf.mxu0
        %v1961 = vadd.f32 %v1817, %v1960
        %v1962 = vpop.f32.mrf.mxu0
        %1963 = vdwg.mxu0
        %v1964 = vmax.f32 %v1902, 0.0
        %v1965 = vmax.f32 %v1905, 0.0
        %v1966 = vmax.f32 %v1910, 0.0
        %v1967 = vmax.f32 %v1913, 0.0
        %v1968 = vmax.f32 %v1918, 0.0
        %v1969 = vmax.f32 %v1921, 0.0
        %v1970 = vmax.f32 %v1926, 0.0
        %v1971 = vmax.f32 %v1929, 0.0
        %v1972 = vmax.f32 %v1934, 0.0
        %v1973 = vmax.f32 %v1937, 0.0
        %v1974 = vmax.f32 %v1942, 0.0
        %v1975 = vmax.f32 %v1945, 0.0
        %v1976 = vmax.f32 %v1950, 0.0
        %v1977 = vmax.f32 %v1953, 0.0
        %v1978 = vmax.f32 %v1958, 0.0
        %v1979 = vmax.f32 %v1961, 0.0
        %v1980 = vpack.c.bf16 %v1965, %v1964
        %v1981 = vpack.c.bf16 %v1967, %v1966
        %v1982 = vpack.c.bf16 %v1969, %v1968
        %v1983 = vpack.c.bf16 %v1971, %v1970
        %v1984 = vpack.c.bf16 %v1973, %v1972
        %v1985 = vpack.c.bf16 %v1975, %v1974
        %v1986 = vpack.c.bf16 %v1977, %v1976
        %v1987 = vpack.c.bf16 %v1979, %v1978
        %v1988 = vld [vmem:[#allocation10] sm:$0xf]
        %v1989 = vld [vmem:[#allocation10 + $0x4] sm:$0xf]
        %v1990 = vld [vmem:[#allocation10 + $0x8] sm:$0xf]
        %v1991 = vld [vmem:[#allocation10 + $0xc] sm:$0xf]
        %v1992 = vld [vmem:[#allocation10 + $0x10] sm:$0xf]
        %v1993 = vld [vmem:[#allocation10 + $0x14] sm:$0xf]
        %v1994 = vld [vmem:[#allocation10 + $0x18] sm:$0xf]
        %v1995 = vld [vmem:[#allocation10 + $0x1c] sm:$0xf]
        %v1996 = vld [vmem:[#allocation10 + $0x20] sm:$0xf]
        %v1997 = vld [vmem:[#allocation10 + $0x24] sm:$0xf]
        %v1998 = vld [vmem:[#allocation10 + $0x28] sm:$0xf]
        %v1999 = vld [vmem:[#allocation10 + $0x2c] sm:$0xf]
        %v2000 = vld [vmem:[#allocation10 + $0x30] sm:$0xf]
        %v2001 = vld [vmem:[#allocation10 + $0x34] sm:$0xf]
        %v2002 = vld [vmem:[#allocation10 + $0x38] sm:$0xf]
        %v2003 = vld [vmem:[#allocation10 + $0x3c] sm:$0xf]
        %v2004 = vld [vmem:[%s7] sm:$0x1]
        %v2006 = vlaneseq
        %v2007 = vshrl.u32 %v2006, 7
        %v2008 = vsub.s32 0, %v2007
        %v2009 = vrot.slane %v2004, %v2008
        %v2027 = vunpack.c.l.b16 %v1988
        %v2028 = vunpack.c.l.b16 %v1989
        %v2029 = vunpack.c.l.b16 %v1990
        %v2030 = vunpack.c.l.b16 %v1991
        %v2031 = vunpack.c.l.b16 %v1992
        %v2032 = vunpack.c.l.b16 %v1993
        %v2033 = vunpack.c.l.b16 %v1994
        %v2034 = vunpack.c.l.b16 %v1995
        %v2035 = vunpack.c.l.b16 %v1996
        %v2036 = vunpack.c.l.b16 %v1997
        %v2037 = vunpack.c.l.b16 %v1998
        %v2038 = vunpack.c.l.b16 %v1999
        %v2039 = vunpack.c.l.b16 %v2000
        %v2040 = vunpack.c.l.b16 %v2001
        %v2041 = vunpack.c.l.b16 %v2002
        %v2042 = vunpack.c.l.b16 %v2003
        %v2043 = vpack.c.b16 %v2028, %v2027
        %v2044 = vpack.c.b16 %v2030, %v2029
        %v2045 = vpack.c.b16 %v2032, %v2031
        %v2046 = vpack.c.b16 %v2034, %v2033
        %v2047 = vpack.c.b16 %v2036, %v2035
        %v2048 = vpack.c.b16 %v2038, %v2037
        %v2049 = vpack.c.b16 %v2040, %v2039
        %v2050 = vpack.c.b16 %v2042, %v2041
        %2059 = vmatprep.subr.bf16.mxu0 0
        %2060 = vmatpush1.bf16.msra.mxu0 %v2050
        %2061 = vmatprep.subr.bf16.mxu0 0
        %2062 = vmatpush1.bf16.msra.mxu0 %v2049
        %2063 = vmatprep.subr.bf16.mxu0 0
        %2064 = vmatpush1.bf16.msra.mxu0 %v2048
        %2065 = vmatprep.subr.bf16.mxu0 0
        %2066 = vmatpush1.bf16.msra.mxu0 %v2047
        %2067 = vmatprep.subr.bf16.mxu0 0
        %2068 = vmatpush1.bf16.msra.mxu0 %v2046
        %2069 = vmatprep.subr.bf16.mxu0 0
        %2070 = vmatpush1.bf16.msra.mxu0 %v2045
        %2071 = vmatprep.subr.bf16.mxu0 0
        %2072 = vmatpush1.bf16.msra.mxu0 %v2044
        %2073 = vmatprep.subr.bf16.mxu0 0
        %2074 = vmatpush1.bf16.msra.mxu0 %v2043
        %2075 = vmatprep.subr.bf16.mxu0 0
        %2076 = vmatpush2.bf16.msra.mxu0 0
        %2077 = vmatprep.subr.bf16.mxu0 0
        %2078 = vmatpush2.bf16.msra.mxu0 0
        %2079 = vmatprep.subr.bf16.mxu0 0
        %2080 = vmatpush2.bf16.msra.mxu0 0
        %2081 = vmatprep.subr.bf16.mxu0 0
        %2082 = vmatpush2.bf16.msra.mxu0 0
        %2083 = vmatprep.subr.bf16.mxu0 0
        %2084 = vmatpush2.bf16.msra.mxu0 0
        %2085 = vmatprep.subr.bf16.mxu0 0
        %2086 = vmatpush2.bf16.msra.mxu0 0
        %2087 = vmatprep.subr.bf16.mxu0 0
        %2088 = vmatpush2.bf16.msra.mxu0 0
        %2089 = vmatprep.subr.bf16.mxu0 0
        %2090 = vmatpush2.bf16.msra.mxu0 0
        %2091 = vmatprep.mubr.bf16.mxu0 0
        %2092 = vmatmul.mubr.bf16.gmra.mxu0 %v1980
        %v2093 = vpop.f32.mrf.mxu0
        %v2094 = vadd.f32 %v2009, %v2093
        %v2095 = vpop.f32.mrf.mxu0
        %v2096 = vpop.f32.mrf.mxu0
        %v2097 = vadd.f32 %v2009, %v2096
        %v2098 = vpop.f32.mrf.mxu0
        %2099 = vmatprep.mubr.bf16.mxu0 0
        %2100 = vmatmul.mubr.bf16.gmra.mxu0 %v1981
        %v2101 = vpop.f32.mrf.mxu0
        %v2102 = vadd.f32 %v2009, %v2101
        %v2103 = vpop.f32.mrf.mxu0
        %v2104 = vpop.f32.mrf.mxu0
        %v2105 = vadd.f32 %v2009, %v2104
        %v2106 = vpop.f32.mrf.mxu0
        %2107 = vmatprep.mubr.bf16.mxu0 0
        %2108 = vmatmul.mubr.bf16.gmra.mxu0 %v1982
        %v2109 = vpop.f32.mrf.mxu0
        %v2110 = vadd.f32 %v2009, %v2109
        %v2111 = vpop.f32.mrf.mxu0
        %v2112 = vpop.f32.mrf.mxu0
        %v2113 = vadd.f32 %v2009, %v2112
        %v2114 = vpop.f32.mrf.mxu0
        %2115 = vmatprep.mubr.bf16.mxu0 0
        %2116 = vmatmul.mubr.bf16.gmra.mxu0 %v1983
        %v2117 = vpop.f32.mrf.mxu0
        %v2118 = vadd.f32 %v2009, %v2117
        %v2119 = vpop.f32.mrf.mxu0
        %v2120 = vpop.f32.mrf.mxu0
        %v2121 = vadd.f32 %v2009, %v2120
        %v2122 = vpop.f32.mrf.mxu0
        %2123 = vmatprep.mubr.bf16.mxu0 0
        %2124 = vmatmul.mubr.bf16.gmra.mxu0 %v1984
        %v2125 = vpop.f32.mrf.mxu0
        %v2126 = vadd.f32 %v2009, %v2125
        %v2127 = vpop.f32.mrf.mxu0
        %v2128 = vpop.f32.mrf.mxu0
        %v2129 = vadd.f32 %v2009, %v2128
        %v2130 = vpop.f32.mrf.mxu0
        %2131 = vmatprep.mubr.bf16.mxu0 0
        %2132 = vmatmul.mubr.bf16.gmra.mxu0 %v1985
        %v2133 = vpop.f32.mrf.mxu0
        %v2134 = vadd.f32 %v2009, %v2133
        %v2135 = vpop.f32.mrf.mxu0
        %v2136 = vpop.f32.mrf.mxu0
        %v2137 = vadd.f32 %v2009, %v2136
        %v2138 = vpop.f32.mrf.mxu0
        %2139 = vmatprep.mubr.bf16.mxu0 0
        %2140 = vmatmul.mubr.bf16.gmra.mxu0 %v1986
        %v2141 = vpop.f32.mrf.mxu0
        %v2142 = vadd.f32 %v2009, %v2141
        %v2143 = vpop.f32.mrf.mxu0
        %v2144 = vpop.f32.mrf.mxu0
        %v2145 = vadd.f32 %v2009, %v2144
        %v2146 = vpop.f32.mrf.mxu0
        %2147 = vmatprep.mubr.bf16.mxu0 0
        %2148 = vmatmul.mubr.bf16.gmra.mxu0 %v1987
        %v2149 = vpop.f32.mrf.mxu0
        %v2150 = vadd.f32 %v2009, %v2149
        %v2151 = vpop.f32.mrf.mxu0
        %v2152 = vpop.f32.mrf.mxu0
        %v2153 = vadd.f32 %v2009, %v2152
        %v2154 = vpop.f32.mrf.mxu0
        %2155 = vdwg.mxu0
        %v2156 = vld [vmem:[%s419] sm:$0xff]
        %v2157 = vld [vmem:[%s419 + $0x8] sm:$0xff]
        %v2158 = vld [vmem:[%s419 + $0x10] sm:$0xff]
        %v2159 = vld [vmem:[%s419 + $0x18] sm:$0xff]
        %v2160 = vld [vmem:[%s419 + $0x20] sm:$0xff]
        %v2161 = vld [vmem:[%s419 + $0x28] sm:$0xff]
        %v2162 = vld [vmem:[%s419 + $0x30] sm:$0xff]
        %v2163 = vld [vmem:[%s419 + $0x38] sm:$0xff]
        %v2164 = vld [vmem:[%s419 + $0x40] sm:$0xff]
        %v2165 = vld [vmem:[%s419 + $0x48] sm:$0xff]
        %v2166 = vld [vmem:[%s419 + $0x50] sm:$0xff]
        %v2167 = vld [vmem:[%s419 + $0x58] sm:$0xff]
        %v2168 = vld [vmem:[%s419 + $0x60] sm:$0xff]
        %v2169 = vld [vmem:[%s419 + $0x68] sm:$0xff]
        %v2170 = vld [vmem:[%s419 + $0x70] sm:$0xff]
        %v2171 = vld [vmem:[%s419 + $0x78] sm:$0xff]
        %vm2172 = vcmp.ge.s32.totalorder %v2156, 3006477107
        %vm2173 = vcmp.ge.s32.totalorder %v2157, 3006477107
        %vm2174 = vcmp.ge.s32.totalorder %v2158, 3006477107
        %vm2175 = vcmp.ge.s32.totalorder %v2159, 3006477107
        %vm2176 = vcmp.ge.s32.totalorder %v2160, 3006477107
        %vm2177 = vcmp.ge.s32.totalorder %v2161, 3006477107
        %vm2178 = vcmp.ge.s32.totalorder %v2162, 3006477107
        %vm2179 = vcmp.ge.s32.totalorder %v2163, 3006477107
        %vm2180 = vcmp.ge.s32.totalorder %v2164, 3006477107
        %vm2181 = vcmp.ge.s32.totalorder %v2165, 3006477107
        %vm2182 = vcmp.ge.s32.totalorder %v2166, 3006477107
        %vm2183 = vcmp.ge.s32.totalorder %v2167, 3006477107
        %vm2184 = vcmp.ge.s32.totalorder %v2168, 3006477107
        %vm2185 = vcmp.ge.s32.totalorder %v2169, 3006477107
        %vm2186 = vcmp.ge.s32.totalorder %v2170, 3006477107
        %vm2187 = vcmp.ge.s32.totalorder %v2171, 3006477107
        %v2188 = vsel %vm2172, %v2094, 0.0
        %v2189 = vsel %vm2173, %v2097, 0.0
        %v2190 = vsel %vm2174, %v2102, 0.0
        %v2191 = vsel %vm2175, %v2105, 0.0
        %v2192 = vsel %vm2176, %v2110, 0.0
        %v2193 = vsel %vm2177, %v2113, 0.0
        %v2194 = vsel %vm2178, %v2118, 0.0
        %v2195 = vsel %vm2179, %v2121, 0.0
        %v2196 = vsel %vm2180, %v2126, 0.0
        %v2197 = vsel %vm2181, %v2129, 0.0
        %v2198 = vsel %vm2182, %v2134, 0.0
        %v2199 = vsel %vm2183, %v2137, 0.0
        %v2200 = vsel %vm2184, %v2142, 0.0
        %v2201 = vsel %vm2185, %v2145, 0.0
        %v2202 = vsel %vm2186, %v2150, 0.0
        %v2203 = vsel %vm2187, %v2153, 0.0
        %v2204 = vmax.f32 %v2188, 0.0
        %v2205 = vmax.f32 %v2189, 0.0
        %v2206 = vmax.f32 %v2190, 0.0
        %v2207 = vmax.f32 %v2191, 0.0
        %v2208 = vmax.f32 %v2192, 0.0
        %v2209 = vmax.f32 %v2193, 0.0
        %v2210 = vmax.f32 %v2194, 0.0
        %v2211 = vmax.f32 %v2195, 0.0
        %v2212 = vmax.f32 %v2196, 0.0
        %v2213 = vmax.f32 %v2197, 0.0
        %v2214 = vmax.f32 %v2198, 0.0
        %v2215 = vmax.f32 %v2199, 0.0
        %v2216 = vmax.f32 %v2200, 0.0
        %v2217 = vmax.f32 %v2201, 0.0
        %v2218 = vmax.f32 %v2202, 0.0
        %v2219 = vmax.f32 %v2203, 0.0
        %v2220 = vpack.c.bf16 %v2205, %v2204
        %v2221 = vpack.c.bf16 %v2207, %v2206
        %v2222 = vpack.c.bf16 %v2209, %v2208
        %v2223 = vpack.c.bf16 %v2211, %v2210
        %v2224 = vpack.c.bf16 %v2213, %v2212
        %v2225 = vpack.c.bf16 %v2215, %v2214
        %v2226 = vpack.c.bf16 %v2217, %v2216
        %v2227 = vpack.c.bf16 %v2219, %v2218
        %v2228 = vld [vmem:[#allocation11] sm:$0xf]
        %v2229 = vld [vmem:[#allocation11 + $0x4] sm:$0xf]
        %v2230 = vld [vmem:[#allocation11 + $0x8] sm:$0xf]
        %v2231 = vld [vmem:[#allocation11 + $0xc] sm:$0xf]
        %v2232 = vld [vmem:[#allocation11 + $0x10] sm:$0xf]
        %v2233 = vld [vmem:[#allocation11 + $0x14] sm:$0xf]
        %v2234 = vld [vmem:[#allocation11 + $0x18] sm:$0xf]
        %v2235 = vld [vmem:[#allocation11 + $0x1c] sm:$0xf]
        %v2236 = vld [vmem:[#allocation11 + $0x20] sm:$0xf]
        %v2237 = vld [vmem:[#allocation11 + $0x24] sm:$0xf]
        %v2238 = vld [vmem:[#allocation11 + $0x28] sm:$0xf]
        %v2239 = vld [vmem:[#allocation11 + $0x2c] sm:$0xf]
        %v2240 = vld [vmem:[#allocation11 + $0x30] sm:$0xf]
        %v2241 = vld [vmem:[#allocation11 + $0x34] sm:$0xf]
        %v2242 = vld [vmem:[#allocation11 + $0x38] sm:$0xf]
        %v2243 = vld [vmem:[#allocation11 + $0x3c] sm:$0xf]
        %v2244 = vld [vmem:[%s9] sm:$0x1]
        %v2246 = vlaneseq
        %v2247 = vshrl.u32 %v2246, 7
        %v2248 = vsub.s32 0, %v2247
        %v2249 = vrot.slane %v2244, %v2248
        %v2267 = vunpack.c.l.b16 %v2228
        %v2268 = vunpack.c.l.b16 %v2229
        %v2269 = vunpack.c.l.b16 %v2230
        %v2270 = vunpack.c.l.b16 %v2231
        %v2271 = vunpack.c.l.b16 %v2232
        %v2272 = vunpack.c.l.b16 %v2233
        %v2273 = vunpack.c.l.b16 %v2234
        %v2274 = vunpack.c.l.b16 %v2235
        %v2275 = vunpack.c.l.b16 %v2236
        %v2276 = vunpack.c.l.b16 %v2237
        %v2277 = vunpack.c.l.b16 %v2238
        %v2278 = vunpack.c.l.b16 %v2239
        %v2279 = vunpack.c.l.b16 %v2240
        %v2280 = vunpack.c.l.b16 %v2241
        %v2281 = vunpack.c.l.b16 %v2242
        %v2282 = vunpack.c.l.b16 %v2243
        %v2283 = vpack.c.b16 %v2268, %v2267
        %v2284 = vpack.c.b16 %v2270, %v2269
        %v2285 = vpack.c.b16 %v2272, %v2271
        %v2286 = vpack.c.b16 %v2274, %v2273
        %v2287 = vpack.c.b16 %v2276, %v2275
        %v2288 = vpack.c.b16 %v2278, %v2277
        %v2289 = vpack.c.b16 %v2280, %v2279
        %v2290 = vpack.c.b16 %v2282, %v2281
        %2299 = vmatprep.subr.bf16.mxu0 0
        %2300 = vmatpush1.bf16.msra.mxu0 %v2290
        %2301 = vmatprep.subr.bf16.mxu0 0
        %2302 = vmatpush1.bf16.msra.mxu0 %v2289
        %2303 = vmatprep.subr.bf16.mxu0 0
        %2304 = vmatpush1.bf16.msra.mxu0 %v2288
        %2305 = vmatprep.subr.bf16.mxu0 0
        %2306 = vmatpush1.bf16.msra.mxu0 %v2287
        %2307 = vmatprep.subr.bf16.mxu0 0
        %2308 = vmatpush1.bf16.msra.mxu0 %v2286
        %2309 = vmatprep.subr.bf16.mxu0 0
        %2310 = vmatpush1.bf16.msra.mxu0 %v2285
        %2311 = vmatprep.subr.bf16.mxu0 0
        %2312 = vmatpush1.bf16.msra.mxu0 %v2284
        %2313 = vmatprep.subr.bf16.mxu0 0
        %2314 = vmatpush1.bf16.msra.mxu0 %v2283
        %2315 = vmatprep.subr.bf16.mxu0 0
        %2316 = vmatpush2.bf16.msra.mxu0 0
        %2317 = vmatprep.subr.bf16.mxu0 0
        %2318 = vmatpush2.bf16.msra.mxu0 0
        %2319 = vmatprep.subr.bf16.mxu0 0
        %2320 = vmatpush2.bf16.msra.mxu0 0
        %2321 = vmatprep.subr.bf16.mxu0 0
        %2322 = vmatpush2.bf16.msra.mxu0 0
        %2323 = vmatprep.subr.bf16.mxu0 0
        %2324 = vmatpush2.bf16.msra.mxu0 0
        %2325 = vmatprep.subr.bf16.mxu0 0
        %2326 = vmatpush2.bf16.msra.mxu0 0
        %2327 = vmatprep.subr.bf16.mxu0 0
        %2328 = vmatpush2.bf16.msra.mxu0 0
        %2329 = vmatprep.subr.bf16.mxu0 0
        %2330 = vmatpush2.bf16.msra.mxu0 0
        %2331 = vmatprep.mubr.bf16.mxu0 0
        %2332 = vmatmul.mubr.bf16.gmra.mxu0 %v2220
        %v2333 = vpop.f32.mrf.mxu0
        %v2334 = vadd.f32 %v2249, %v2333
        %v2335 = vpop.f32.mrf.mxu0
        %v2336 = vpop.f32.mrf.mxu0
        %v2337 = vadd.f32 %v2249, %v2336
        %v2338 = vpop.f32.mrf.mxu0
        %2339 = vmatprep.mubr.bf16.mxu0 0
        %2340 = vmatmul.mubr.bf16.gmra.mxu0 %v2221
        %v2341 = vpop.f32.mrf.mxu0
        %v2342 = vadd.f32 %v2249, %v2341
        %v2343 = vpop.f32.mrf.mxu0
        %v2344 = vpop.f32.mrf.mxu0
        %v2345 = vadd.f32 %v2249, %v2344
        %v2346 = vpop.f32.mrf.mxu0
        %2347 = vmatprep.mubr.bf16.mxu0 0
        %2348 = vmatmul.mubr.bf16.gmra.mxu0 %v2222
        %v2349 = vpop.f32.mrf.mxu0
        %v2350 = vadd.f32 %v2249, %v2349
        %v2351 = vpop.f32.mrf.mxu0
        %v2352 = vpop.f32.mrf.mxu0
        %v2353 = vadd.f32 %v2249, %v2352
        %v2354 = vpop.f32.mrf.mxu0
        %2355 = vmatprep.mubr.bf16.mxu0 0
        %2356 = vmatmul.mubr.bf16.gmra.mxu0 %v2223
        %v2357 = vpop.f32.mrf.mxu0
        %v2358 = vadd.f32 %v2249, %v2357
        %v2359 = vpop.f32.mrf.mxu0
        %v2360 = vpop.f32.mrf.mxu0
        %v2361 = vadd.f32 %v2249, %v2360
        %v2362 = vpop.f32.mrf.mxu0
        %2363 = vmatprep.mubr.bf16.mxu0 0
        %2364 = vmatmul.mubr.bf16.gmra.mxu0 %v2224
        %v2365 = vpop.f32.mrf.mxu0
        %v2366 = vadd.f32 %v2249, %v2365
        %v2367 = vpop.f32.mrf.mxu0
        %v2368 = vpop.f32.mrf.mxu0
        %v2369 = vadd.f32 %v2249, %v2368
        %v2370 = vpop.f32.mrf.mxu0
        %2371 = vmatprep.mubr.bf16.mxu0 0
        %2372 = vmatmul.mubr.bf16.gmra.mxu0 %v2225
        %v2373 = vpop.f32.mrf.mxu0
        %v2374 = vadd.f32 %v2249, %v2373
        %v2375 = vpop.f32.mrf.mxu0
        %v2376 = vpop.f32.mrf.mxu0
        %v2377 = vadd.f32 %v2249, %v2376
        %v2378 = vpop.f32.mrf.mxu0
        %2379 = vmatprep.mubr.bf16.mxu0 0
        %2380 = vmatmul.mubr.bf16.gmra.mxu0 %v2226
        %v2381 = vpop.f32.mrf.mxu0
        %v2382 = vadd.f32 %v2249, %v2381
        %v2383 = vpop.f32.mrf.mxu0
        %v2384 = vpop.f32.mrf.mxu0
        %v2385 = vadd.f32 %v2249, %v2384
        %v2386 = vpop.f32.mrf.mxu0
        %2387 = vmatprep.mubr.bf16.mxu0 0
        %2388 = vmatmul.mubr.bf16.gmra.mxu0 %v2227
        %v2389 = vpop.f32.mrf.mxu0
        %v2390 = vadd.f32 %v2249, %v2389
        %v2391 = vpop.f32.mrf.mxu0
        %v2392 = vpop.f32.mrf.mxu0
        %v2393 = vadd.f32 %v2249, %v2392
        %v2394 = vpop.f32.mrf.mxu0
        %2395 = vdwg.mxu0
        %2396 = vmax.xlane.f32.xlu0 %v2334
        %v2397 = vpop.xlane.xlu0 %2396
        %2398 = vmax.xlane.f32.xlu0 %v2337
        %v2399 = vpop.xlane.xlu0 %2398
        %2400 = vmax.xlane.f32.xlu0 %v2342
        %v2401 = vpop.xlane.xlu0 %2400
        %2402 = vmax.xlane.f32.xlu0 %v2345
        %v2403 = vpop.xlane.xlu0 %2402
        %2404 = vmax.xlane.f32.xlu0 %v2350
        %v2405 = vpop.xlane.xlu0 %2404
        %2406 = vmax.xlane.f32.xlu0 %v2353
        %v2407 = vpop.xlane.xlu0 %2406
        %2408 = vmax.xlane.f32.xlu0 %v2358
        %v2409 = vpop.xlane.xlu0 %2408
        %2410 = vmax.xlane.f32.xlu0 %v2361
        %v2411 = vpop.xlane.xlu0 %2410
        %2412 = vmax.xlane.f32.xlu0 %v2366
        %v2413 = vpop.xlane.xlu0 %2412
        %2414 = vmax.xlane.f32.xlu0 %v2369
        %v2415 = vpop.xlane.xlu0 %2414
        %2416 = vmax.xlane.f32.xlu0 %v2374
        %v2417 = vpop.xlane.xlu0 %2416
        %2418 = vmax.xlane.f32.xlu0 %v2377
        %v2419 = vpop.xlane.xlu0 %2418
        %2420 = vmax.xlane.f32.xlu0 %v2382
        %v2421 = vpop.xlane.xlu0 %2420
        %2422 = vmax.xlane.f32.xlu0 %v2385
        %v2423 = vpop.xlane.xlu0 %2422
        %2424 = vmax.xlane.f32.xlu0 %v2390
        %v2425 = vpop.xlane.xlu0 %2424
        %2426 = vmax.xlane.f32.xlu0 %v2393
        %v2427 = vpop.xlane.xlu0 %2426
        %v2428 = vsub.f32 %v2334, %v2397
        %v2429 = vsub.f32 %v2337, %v2399
        %v2430 = vsub.f32 %v2342, %v2401
        %v2431 = vsub.f32 %v2345, %v2403
        %v2432 = vsub.f32 %v2350, %v2405
        %v2433 = vsub.f32 %v2353, %v2407
        %v2434 = vsub.f32 %v2358, %v2409
        %v2435 = vsub.f32 %v2361, %v2411
        %v2436 = vsub.f32 %v2366, %v2413
        %v2437 = vsub.f32 %v2369, %v2415
        %v2438 = vsub.f32 %v2374, %v2417
        %v2439 = vsub.f32 %v2377, %v2419
        %v2440 = vsub.f32 %v2382, %v2421
        %v2441 = vsub.f32 %v2385, %v2423
        %v2442 = vsub.f32 %v2390, %v2425
        %v2443 = vsub.f32 %v2393, %v2427
        %v2444 = vmul.f32 %v2428, 1.442695
        %v2445 = vpow.pop %v2444
        %v2446 = vmul.f32 %v2429, 1.442695
        %v2447 = vpow.pop %v2446
        %v2448 = vmul.f32 %v2430, 1.442695
        %v2449 = vpow.pop %v2448
        %v2450 = vmul.f32 %v2431, 1.442695
        %v2451 = vpow.pop %v2450
        %v2452 = vmul.f32 %v2432, 1.442695
        %v2453 = vpow.pop %v2452
        %v2454 = vmul.f32 %v2433, 1.442695
        %v2455 = vpow.pop %v2454
        %v2456 = vmul.f32 %v2434, 1.442695
        %v2457 = vpow.pop %v2456
        %v2458 = vmul.f32 %v2435, 1.442695
        %v2459 = vpow.pop %v2458
        %v2460 = vmul.f32 %v2436, 1.442695
        %v2461 = vpow.pop %v2460
        %v2462 = vmul.f32 %v2437, 1.442695
        %v2463 = vpow.pop %v2462
        %v2464 = vmul.f32 %v2438, 1.442695
        %v2465 = vpow.pop %v2464
        %v2466 = vmul.f32 %v2439, 1.442695
        %v2467 = vpow.pop %v2466
        %v2468 = vmul.f32 %v2440, 1.442695
        %v2469 = vpow.pop %v2468
        %v2470 = vmul.f32 %v2441, 1.442695
        %v2471 = vpow.pop %v2470
        %v2472 = vmul.f32 %v2442, 1.442695
        %v2473 = vpow.pop %v2472
        %v2474 = vmul.f32 %v2443, 1.442695
        %v2475 = vpow.pop %v2474
        %2476 = vadd.xlane.f32.xlu0 %v2445
        %v2477 = vpop.xlane.xlu0 %2476
        %2478 = vadd.xlane.f32.xlu0 %v2447
        %v2479 = vpop.xlane.xlu0 %2478
        %2480 = vadd.xlane.f32.xlu0 %v2449
        %v2481 = vpop.xlane.xlu0 %2480
        %2482 = vadd.xlane.f32.xlu0 %v2451
        %v2483 = vpop.xlane.xlu0 %2482
        %2484 = vadd.xlane.f32.xlu0 %v2453
        %v2485 = vpop.xlane.xlu0 %2484
        %2486 = vadd.xlane.f32.xlu0 %v2455
        %v2487 = vpop.xlane.xlu0 %2486
        %2488 = vadd.xlane.f32.xlu0 %v2457
        %v2489 = vpop.xlane.xlu0 %2488
        %2490 = vadd.xlane.f32.xlu0 %v2459
        %v2491 = vpop.xlane.xlu0 %2490
        %2492 = vadd.xlane.f32.xlu0 %v2461
        %v2493 = vpop.xlane.xlu0 %2492
        %2494 = vadd.xlane.f32.xlu0 %v2463
        %v2495 = vpop.xlane.xlu0 %2494
        %2496 = vadd.xlane.f32.xlu0 %v2465
        %v2497 = vpop.xlane.xlu0 %2496
        %2498 = vadd.xlane.f32.xlu0 %v2467
        %v2499 = vpop.xlane.xlu0 %2498
        %2500 = vadd.xlane.f32.xlu0 %v2469
        %v2501 = vpop.xlane.xlu0 %2500
        %2502 = vadd.xlane.f32.xlu0 %v2471
        %v2503 = vpop.xlane.xlu0 %2502
        %2504 = vadd.xlane.f32.xlu0 %v2473
        %v2505 = vpop.xlane.xlu0 %2504
        %2506 = vadd.xlane.f32.xlu0 %v2475
        %v2507 = vpop.xlane.xlu0 %2506
        %v2508 = vrcp.pop %v2477
        %v2509 = vmul.f32 1.0, %v2508
        %v2510 = vrcp.pop %v2479
        %v2511 = vmul.f32 1.0, %v2510
        %v2512 = vrcp.pop %v2481
        %v2513 = vmul.f32 1.0, %v2512
        %v2514 = vrcp.pop %v2483
        %v2515 = vmul.f32 1.0, %v2514
        %v2516 = vrcp.pop %v2485
        %v2517 = vmul.f32 1.0, %v2516
        %v2518 = vrcp.pop %v2487
        %v2519 = vmul.f32 1.0, %v2518
        %v2520 = vrcp.pop %v2489
        %v2521 = vmul.f32 1.0, %v2520
        %v2522 = vrcp.pop %v2491
        %v2523 = vmul.f32 1.0, %v2522
        %v2524 = vrcp.pop %v2493
        %v2525 = vmul.f32 1.0, %v2524
        %v2526 = vrcp.pop %v2495
        %v2527 = vmul.f32 1.0, %v2526
        %v2528 = vrcp.pop %v2497
        %v2529 = vmul.f32 1.0, %v2528
        %v2530 = vrcp.pop %v2499
        %v2531 = vmul.f32 1.0, %v2530
        %v2532 = vrcp.pop %v2501
        %v2533 = vmul.f32 1.0, %v2532
        %v2534 = vrcp.pop %v2503
        %v2535 = vmul.f32 1.0, %v2534
        %v2536 = vrcp.pop %v2505
        %v2537 = vmul.f32 1.0, %v2536
        %v2538 = vrcp.pop %v2507
        %v2539 = vmul.f32 1.0, %v2538
        %v2540 = vmul.f32 %v2445, %v2509
        %v2541 = vmul.f32 %v2447, %v2511
        %v2542 = vmul.f32 %v2449, %v2513
        %v2543 = vmul.f32 %v2451, %v2515
        %v2544 = vmul.f32 %v2453, %v2517
        %v2545 = vmul.f32 %v2455, %v2519
        %v2546 = vmul.f32 %v2457, %v2521
        %v2547 = vmul.f32 %v2459, %v2523
        %v2548 = vmul.f32 %v2461, %v2525
        %v2549 = vmul.f32 %v2463, %v2527
        %v2550 = vmul.f32 %v2465, %v2529
        %v2551 = vmul.f32 %v2467, %v2531
        %v2552 = vmul.f32 %v2469, %v2533
        %v2553 = vmul.f32 %v2471, %v2535
        %v2554 = vmul.f32 %v2473, %v2537
        %v2555 = vmul.f32 %v2475, %v2539
        %2556 = vst [vmem:[%s476] sm:$0xff] %v2540
        %2557 = vst [vmem:[%s476 + $0x8] sm:$0xff] %v2541
        %2558 = vst [vmem:[%s476 + $0x10] sm:$0xff] %v2542
        %2559 = vst [vmem:[%s476 + $0x18] sm:$0xff] %v2543
        %2560 = vst [vmem:[%s476 + $0x20] sm:$0xff] %v2544
        %2561 = vst [vmem:[%s476 + $0x28] sm:$0xff] %v2545
        %2562 = vst [vmem:[%s476 + $0x30] sm:$0xff] %v2546
        %2563 = vst [vmem:[%s476 + $0x38] sm:$0xff] %v2547
        %2564 = vst [vmem:[%s476 + $0x40] sm:$0xff] %v2548
        %2565 = vst [vmem:[%s476 + $0x48] sm:$0xff] %v2549
        %2566 = vst [vmem:[%s476 + $0x50] sm:$0xff] %v2550
        %2567 = vst [vmem:[%s476 + $0x58] sm:$0xff] %v2551
        %2568 = vst [vmem:[%s476 + $0x60] sm:$0xff] %v2552
        %2569 = vst [vmem:[%s476 + $0x68] sm:$0xff] %v2553
        %2570 = vst [vmem:[%s476 + $0x70] sm:$0xff] %v2554
        %2571 = vst [vmem:[%s476 + $0x78] sm:$0xff] %v2555
        %s2572 = sand.u32 %s260, 1
        %s2573 = scalar_lea.sflag [#allocation4], %s2572
        %s2574 = sand.u32 %s260, 1
        %s2575 = smul.addr %s2574, 128
        %s2576 = scalar_lea.vmem [#allocation13], %s2575
        // Predicated region
        $region85: #{tpu_custom_call.1} parent=59 // pred_check
          %p2577 = pneg %p270
        $region86: #{tpu_custom_call.1} parent=59 // pred_check_branch
          %2579 = sbr.rel (%p2577) target = $region88
        $region87: #{tpu_custom_call.1} parent=59 // pred_region
          %s2580 = smul.u32 16, %s32
          %s2582 = ssub.s32 2048, 2048
          %2583 = vsyncadd %s2573, %s2582
          %s2584 = smul.addr %s2580, 128
          %s2585 = scalar_lea.hbm %s10, %s2584
          %s2586 = sshll.u32 %s2576, 4
          %s2587 = int_to_ptr.vmem [resolvable:$true] %s2586
          %2592 = dma.vmem_to_hbm [thread:$0]  %s2587, 2048, %s2585, %s2573, 128, 128, 8
        $region88: #{tpu_custom_call.1} parent=59 // pred_fallthru
          _
      $region60: #{tpu_custom_call.1} parent=5 // pred_fallthru
        _
      %p2593 = scmp.le.s32.totalorder 2, %s27
      // Predicated region
      $region89: #{tpu_custom_call.1} parent=5 // pred_check
        %p2594 = pneg %p2593
      $region90: #{tpu_custom_call.1} parent=5 // pred_check_branch
        %2596 = sbr.rel (%p2594) target = $region92
      $region91: #{tpu_custom_call.1} parent=5 // pred_region
        %s2597 = ssub.s32 %s27, 2
        // Predicated region
        $region93: #{tpu_custom_call.1} parent=91 // pred_check
          %p2598 = pneg %p276
        $region94: #{tpu_custom_call.1} parent=91 // pred_check_branch
          %2600 = sbr.rel (%p2598) target = $region96
        $region95: #{tpu_custom_call.1} parent=91 // pred_region
          %s2601 = sand.u32 %s261, 1
          %s2602 = scalar_lea.sflag [#allocation4], %s2601
          %s2603 = sand.u32 %s261, 1
          %s2604 = smul.addr %s2603, 128
          %s2605 = scalar_lea.vmem [#allocation13], %s2604
          %2606 = dma.done %s2602, 2048
        $region96: #{tpu_custom_call.1} parent=91 // pred_fallthru
          _
      $region92: #{tpu_custom_call.1} parent=5 // pred_fallthru
        _
    $region6: #{tpu_custom_call.1} parent=1 // loop_footer
      %s31 = sadd.s32 1, %s27
    $region7: #{tpu_custom_call.1} parent=1 // loop_footer_branch
      %26 = sbr.rel target = $region3
    $region8: #{tpu_custom_call.1} parent=1 // loop_exit
      _
    %2607 = vsyncpa [#allocation3], 1
    %s2608 = scalar_lea.sflag [#allocation3], 1
    %2609 = vsyncpa %s2608, 1
    %2610 = vsyncpa [#allocation6], 1
    %s2611 = scalar_lea.sflag [#allocation6], 1
    %2612 = vsyncpa %s2611, 1
    %2613 = vsyncpa [#allocation9], 1
    %2614 = vsyncpa [#allocation12], 1
    %2615 = vsyncpa [#allocation4], 1
    %s2616 = scalar_lea.sflag [#allocation4], 1
    %2617 = vsyncpa %s2616, 1

</llo_original>
